<compile_context>
chip_gen: v7x
topology: tpu7x:2x2x1
jax: 0.10.0
libtpu: 0.0.40
codegen_flags: <defaults>
</compile_context>

<pallas_src>
import functools

import jax
import jax.numpy as jnp
from jax.experimental import pallas as pl
from jax.experimental.pallas import tpu as pltpu


# ----------------------------------------------------------------------------
# Helpers
# ----------------------------------------------------------------------------
def _round_up(n, m):
    return ((n + m - 1) // m) * m


def _largest_divisor_leq(n, cap):
    """Largest divisor of n that is <= cap (so the chunked loop is static)."""
    cap = max(1, min(cap, n))
    for d in range(cap, 0, -1):
        if n % d == 0:
            return d
    return 1
    # TODO(synk): for pathological (prime) T this degrades to chunk=1; a
    # masked-tail variant would be needed to keep big chunks in that case.


# ----------------------------------------------------------------------------
# Pallas kernels
# ----------------------------------------------------------------------------
def _lstm_chunk_body(x_ref, wih_ref, whh_ref, b_ref, h_sc, c_sc, gx_sc,
                     out_ref, *, hidden_dim, chunk_t):
    """Shared chunk body: fused input projection + chunk_t recurrence steps.

    x_ref   : (ct, Bb, E)   layer input chunk (f32 or bf16)
    wih_ref : (E, 4H)       W_ih^T
    whh_ref : (H, 4H)       W_hh^T
    b_ref   : (1, 4H)       b_ih + b_hh
    h_sc/c_sc : (Bb, H) f32 VMEM state carried across chunks
    gx_sc   : (ct, Bb, 4H) f32 VMEM scratch for the chunk's input projection
    out_ref : (ct, Bb, H) or None  per-timestep hidden output
    """
    H = hidden_dim
    ct, Bb, E = x_ref.shape

    # One well-filled MXU matmul for the whole chunk (M = ct*Bb); Bb is a
    # multiple of 8 so the (ct, Bb) -> (ct*Bb) merge is sublane-aligned.
    x_flat = x_ref[...].reshape(ct * Bb, E)
    gx_sc[...] = (
        jnp.dot(x_flat, wih_ref[...], preferred_element_type=jnp.float32)
        + b_ref[...]).reshape(ct, Bb, 4 * H)

    compute_dtype = whh_ref.dtype  # bf16 weights -> bf16 MXU operands

    def step(t, carry):
        h, c = carry
        gates = gx_sc[t] + jnp.dot(h.astype(compute_dtype), whh_ref[...],
                                   preferred_element_type=jnp.float32)
        i_g = jax.nn.sigmoid(gates[:, 0 * H:1 * H])   # PyTorch order: i,f,g,o
        f_g = jax.nn.sigmoid(gates[:, 1 * H:2 * H])
        g_g = jnp.tanh(gates[:, 2 * H:3 * H])
        o_g = jax.nn.sigmoid(gates[:, 3 * H:4 * H])
        c_new = f_g * c + i_g * g_g
        h_new = o_g * jnp.tanh(c_new)
        if out_ref is not None:
            out_ref[t] = h_new.astype(out_ref.dtype)
        return h_new, c_new

    # Static trip count, fully unrolled -> scheduler sees the whole chain.
    h_fin, c_fin = jax.lax.fori_loop(0, chunk_t, step,
                                     (h_sc[...], c_sc[...]), unroll=True)
    h_sc[...] = h_fin
    c_sc[...] = c_fin
    return h_fin, c_fin


def _lstm_layer_kernel(x_ref, wih_ref, whh_ref, b_ref, h0_ref, c0_ref,
                       out_ref, hN_ref, cN_ref,
                       h_sc, c_sc, gx_sc, *, hidden_dim, chunk_t):
    """Intermediate LSTM layer: writes per-timestep output + final state."""
    ti = pl.program_id(1)

    @pl.when(ti == 0)
    def _():
        h_sc[...] = h0_ref[...]
        c_sc[...] = c0_ref[...]

    h_fin, c_fin = _lstm_chunk_body(x_ref, wih_ref, whh_ref, b_ref,
                                    h_sc, c_sc, gx_sc, out_ref,
                                    hidden_dim=hidden_dim, chunk_t=chunk_t)

    @pl.when(ti == pl.num_programs(1) - 1)
    def _():
        hN_ref[...] = h_fin
        cN_ref[...] = c_fin


def _lstm_top_fc_kernel(x_ref, wih_ref, whh_ref, b_ref, h0_ref, c0_ref,
                        fcw_ref, fcb_ref,
                        hN_ref, cN_ref, fc_ref,
                        h_sc, c_sc, gx_sc, *, hidden_dim, chunk_t):
    """Top LSTM layer: no per-timestep output; fc+sigmoid fused on h_final."""
    ti = pl.program_id(1)

    @pl.when(ti == 0)
    def _():
        h_sc[...] = h0_ref[...]
        c_sc[...] = c0_ref[...]

    h_fin, c_fin = _lstm_chunk_body(x_ref, wih_ref, whh_ref, b_ref,
                                    h_sc, c_sc, gx_sc, None,
                                    hidden_dim=hidden_dim, chunk_t=chunk_t)

    @pl.when(ti == pl.num_programs(1) - 1)
    def _():
        hN_ref[...] = h_fin
        cN_ref[...] = c_fin
        fc_ref[...] = jax.nn.sigmoid(
            jnp.dot(h_fin, fcw_ref[...], preferred_element_type=jnp.float32)
            + fcb_ref[...])


# ----------------------------------------------------------------------------
# pallas_call wrapper for one LSTM layer
# ----------------------------------------------------------------------------
def lstm_layer(x_tbe, wih_t, whh_t, b, h0, c0, *, chunk_t=32,
               out_dtype=None, fc_w_t=None, fc_b=None,
               vmem_limit_bytes=64 * 1024 * 1024):
    """One LSTM layer (fused input projection + recurrence).

    x_tbe : (T, Bp, E) time-major (Bp multiple of 8; E multiple of 128 or full)
    wih_t : (E, 4H);  whh_t : (H, 4H);  b : (1, 4H);  h0/c0 : (Bp, H)
    If fc_w_t/fc_b are given, this is the top layer: returns (hN, cN, fc_out),
    otherwise returns (out (T, Bp, H), hN, cN).
    """
    T, Bp, E = x_tbe.shape
    H = h0.shape[-1]
    G = 4 * H
    ct = _largest_divisor_leq(T, chunk_t)
    # Two batch blocks when possible so v7x's second TensorCore gets work on
    # the independent ("parallel") batch axis; a 1-TC chip simply iterates.
    Bb = Bp // 2 if (Bp >= 16 and Bp % 16 == 0) else Bp
    grid = (Bp // Bb, T // ct)

    in_specs = [
        pl.BlockSpec((ct, Bb, E), lambda bi, ti: (ti, bi, 0)),
        pl.BlockSpec((E, G), lambda bi, ti: (0, 0)),
        pl.BlockSpec((H, G), lambda bi, ti: (0, 0)),
        pl.BlockSpec((1, G), lambda bi, ti: (0, 0)),
        pl.BlockSpec((Bb, H), lambda bi, ti: (bi, 0)),
        pl.BlockSpec((Bb, H), lambda bi, ti: (bi, 0)),
    ]
    scratch_shapes = [
        pltpu.VMEM((Bb, H), jnp.float32),       # h carry
        pltpu.VMEM((Bb, H), jnp.float32),       # c carry
        pltpu.VMEM((ct, Bb, G), jnp.float32),   # per-chunk gates_x (VMEM only)
    ]
    cparams = pltpu.CompilerParams(
        dimension_semantics=("parallel", "arbitrary"),
        vmem_limit_bytes=vmem_limit_bytes)

    state_spec = pl.BlockSpec((Bb, H), lambda bi, ti: (bi, 0))
    state_shape = jax.ShapeDtypeStruct((Bp, H), jnp.float32)

    if fc_w_t is None:
        out_dtype = x_tbe.dtype if out_dtype is None else out_dtype
        kernel = functools.partial(_lstm_layer_kernel, hidden_dim=H,
                                   chunk_t=ct)
        out, hN, cN = pl.pallas_call(
            kernel,
            out_shape=(jax.ShapeDtypeStruct((T, Bp, H), out_dtype),
                       state_shape, state_shape),
            grid=grid,
            in_specs=in_specs,
            out_specs=(pl.BlockSpec((ct, Bb, H), lambda bi, ti: (ti, bi, 0)),
                       state_spec, state_spec),
            scratch_shapes=scratch_shapes,
            compiler_params=cparams,
        )(x_tbe, wih_t, whh_t, b, h0, c0)
        return out, hN, cN

    kernel = functools.partial(_lstm_top_fc_kernel, hidden_dim=H, chunk_t=ct)
    hN, cN, fc = pl.pallas_call(
        kernel,
        out_shape=(state_shape, state_shape,
                   jax.ShapeDtypeStruct((Bp, 1), jnp.float32)),
        grid=grid,
        in_specs=in_specs + [
            pl.BlockSpec((H, 1), lambda bi, ti: (0, 0)),
            pl.BlockSpec((1, 1), lambda bi, ti: (0, 0)),
        ],
        out_specs=(state_spec, state_spec,
                   pl.BlockSpec((Bb, 1), lambda bi, ti: (bi, 0))),
        scratch_shapes=scratch_shapes,
        compiler_params=cparams,
    )(x_tbe, wih_t, whh_t, b, h0, c0, fc_w_t, fc_b)
    return hN, cN, fc


# ----------------------------------------------------------------------------
# SentimentNet forward
# ----------------------------------------------------------------------------
def init_params(key, vocab_size, embedding_dim, hidden_dim, n_layers,
                output_size):
    keys = jax.random.split(key, 4 * n_layers + 3)
    params = {}
    params["embedding"] = 0.1 * jax.random.normal(
        keys[0], (vocab_size, embedding_dim), jnp.float32)
    for layer in range(n_layers):
        in_dim = embedding_dim if layer == 0 else hidden_dim
        k = 4 * layer + 1
        params[f"w_ih_l{layer}"] = 0.1 * jax.random.normal(
            keys[k + 0], (4 * hidden_dim, in_dim), jnp.float32)
        params[f"w_hh_l{layer}"] = 0.1 * jax.random.normal(
            keys[k + 1], (4 * hidden_dim, hidden_dim), jnp.float32)
        params[f"b_ih_l{layer}"] = 0.1 * jax.random.normal(
            keys[k + 2], (4 * hidden_dim,), jnp.float32)
        params[f"b_hh_l{layer}"] = 0.1 * jax.random.normal(
            keys[k + 3], (4 * hidden_dim,), jnp.float32)
    params["fc_w"] = 0.1 * jax.random.normal(
        keys[-2], (output_size, hidden_dim), jnp.float32)
    params["fc_b"] = 0.1 * jax.random.normal(
        keys[-1], (output_size,), jnp.float32)
    return params


def sentiment_net_forward(params, x, hidden, *, n_layers, hidden_dim,
                          chunk_t=32, param_dtype=jnp.float32):
    """x: (B, T) int32 tokens; hidden: (h0, c0) each (n_layers, B, H).

    Returns (out (B,), (h_n, c_n)) -- matches the PyTorch forward (eval mode).
    param_dtype=jnp.bfloat16 stores weights/activations in bf16 (f32 accum).
    """
    B, T = x.shape
    H = hidden_dim
    h0_all, c0_all = hidden

    # Pad batch to a multiple of 8 (f32 sublane) -- padded rows are junk-but-
    # finite compute and are sliced away at the end.
    Bp = _round_up(B, 8)
    if Bp != B:
        x = jnp.pad(x, ((0, Bp - B), (0, 0)))                 # token 0 pad
        h0_all = jnp.pad(h0_all, ((0, 0), (0, Bp - B), (0, 0)))
        c0_all = jnp.pad(c0_all, ((0, 0), (0, Bp - B), (0, 0)))

    # Pad embedding dim (layer-0 matmul K dim) to a multiple of 128 with zero
    # columns -> lane-dense loads / full MXU K tiles, mathematically a no-op.
    emb = params["embedding"]
    E = emb.shape[-1]
    Ep = _round_up(E, 128)
    if Ep != E:
        emb = jnp.pad(emb, ((0, 0), (0, Ep - E)))
    emb = emb.astype(param_dtype)

    # Time-major gather: transpose the cheap int32 token matrix, not the
    # (B, T, E) float activations.
    layer_in = emb[x.T]                                       # (T, Bp, Ep)

    h_finals, c_finals = [], []
    fc_out = None
    for layer in range(n_layers):
        wih = params[f"w_ih_l{layer}"]                        # (4H, E_in)
        if layer == 0 and Ep != E:
            wih = jnp.pad(wih, ((0, 0), (0, Ep - E)))         # zero-pad K dim
        wih_t = wih.T.astype(param_dtype)                     # (E_in, 4H)
        whh_t = params[f"w_hh_l{layer}"].T.astype(param_dtype)  # (H, 4H)
        b = (params[f"b_ih_l{layer}"] +
             params[f"b_hh_l{layer}"]).reshape(1, -1).astype(jnp.float32)

        if layer == n_layers - 1:
            # Top layer: fc + sigmoid fused on the final hidden state
            # (lstm_out[:, -1, :] == h_n[-1]); per-timestep output not stored.
            hN, cN, fc_out = lstm_layer(
                layer_in, wih_t, whh_t, b, h0_all[layer], c0_all[layer],
                chunk_t=chunk_t,
                fc_w_t=params["fc_w"].T.astype(jnp.float32),   # (H, 1)
                fc_b=params["fc_b"].reshape(1, 1).astype(jnp.float32))
        else:
            layer_in, hN, cN = lstm_layer(
                layer_in, wih_t, whh_t, b, h0_all[layer], c0_all[layer],
                chunk_t=chunk_t, out_dtype=param_dtype)
        h_finals.append(hN)
        c_finals.append(cN)

    # Dropout is an eval-mode no-op.
    out = fc_out[:B, 0]                                       # (B,)
    h_n = jnp.stack(h_finals, axis=0)[:, :B, :]               # (n_layers,B,H)
    c_n = jnp.stack(c_finals, axis=0)[:, :B, :]
    return out, (h_n, c_n)


# ----------------------------------------------------------------------------
# Pure-JAX reference (follows the PyTorch forward literally, incl. full fc)
# ----------------------------------------------------------------------------
def reference_forward(params, x, hidden, *, n_layers, hidden_dim):
    B, T = x.shape
    h0_all, c0_all = hidden
    embeds = params["embedding"][x]
    layer_in = jnp.transpose(embeds, (1, 0, 2))
    H = hidden_dim
    h_finals, c_finals = [], []
    for layer in range(n_layers):
        wih = params[f"w_ih_l{layer}"]
        whh = params[f"w_hh_l{layer}"]
        b = params[f"b_ih_l{layer}"] + params[f"b_hh_l{layer}"]

        def step(carry, x_t):
            h, c = carry
            gates = x_t @ wih.T + h @ whh.T + b
            i = jax.nn.sigmoid(gates[:, 0:H])
            f = jax.nn.sigmoid(gates[:, H:2 * H])
            g = jnp.tanh(gates[:, 2 * H:3 * H])
            o = jax.nn.sigmoid(gates[:, 3 * H:4 * H])
            c_new = f * c + i * g
            h_new = o * jnp.tanh(c_new)
            return (h_new, c_new), h_new

        (hN, cN), outs = jax.lax.scan(step, (h0_all[layer], c0_all[layer]),
                                      layer_in)
        layer_in = outs
        h_finals.append(hN)
        c_finals.append(cN)
    lstm_out = jnp.transpose(layer_in, (1, 0, 2)).reshape(-1, H)
    fc = jax.nn.sigmoid(lstm_out @ params["fc_w"].T + params["fc_b"])
    out = fc.reshape(B, -1)[:, -1]
    return out, (jnp.stack(h_finals), jnp.stack(c_finals))


# ----------------------------------------------------------------------------
if __name__ == "__main__":
    # Small, deterministic config (the real module uses E=400, H=512, etc.)
    vocab_size = 50
    embedding_dim = 32
    hidden_dim = 32
    n_layers = 2
    output_size = 1
    batch = 2
    seq_len = 8

    key = jax.random.PRNGKey(0)
    k_params, k_x = jax.random.split(key)

    params = init_params(k_params, vocab_size, embedding_dim, hidden_dim,
                         n_layers, output_size)

    x = jax.random.randint(k_x, (batch, seq_len), 0, vocab_size,
                           dtype=jnp.int32)
    h0 = jnp.zeros((n_layers, batch, hidden_dim), jnp.float32)
    c0 = jnp.zeros((n_layers, batch, hidden_dim), jnp.float32)

    # f32 path (exact vs. PyTorch-equivalent reference).
    out, (h_n, c_n) = sentiment_net_forward(
        params, x, (h0, c0), n_layers=n_layers, hidden_dim=hidden_dim)
    out = jax.block_until_ready(out)
    h_n = jax.block_until_ready(h_n)
    c_n = jax.block_until_ready(c_n)

    out_ref, (h_ref, c_ref) = reference_forward(
        params, x, (h0, c0), n_layers=n_layers, hidden_dim=hidden_dim)
    assert out.shape == (batch,)
    assert jnp.allclose(out, out_ref, atol=1e-5), "output mismatch"
    assert jnp.allclose(h_n, h_ref, atol=1e-5), "h_n mismatch"
    assert jnp.allclose(c_n, c_ref, atol=1e-5), "c_n mismatch"

    # bf16 weight/activation path (f32 accumulation) -- loose sanity check.
    out_bf, (h_bf, c_bf) = sentiment_net_forward(
        params, x, (h0, c0), n_layers=n_layers, hidden_dim=hidden_dim,
        param_dtype=jnp.bfloat16)
    out_bf = jax.block_until_ready(out_bf)
    assert bool(jnp.all(jnp.isfinite(out_bf)))
    assert jnp.allclose(out_bf, out_ref, atol=1e-1), "bf16 output diverged"
    assert jnp.allclose(h_bf, h_ref, atol=1e-1), "bf16 h_n diverged"

    print("KERNEL_OK")
</pallas_src>

<mosaic_0001>
module attributes {stable_mosaic.version = 11 : i64} {
  func.func @_lstm_layer_kernel(%arg0: i32, %arg1: i32, %arg2: memref<8x8x128xf32, #tpu.memory_space<vmem>>, %arg3: memref<128x128xf32, #tpu.memory_space<vmem>>, %arg4: memref<32x128xf32, #tpu.memory_space<vmem>>, %arg5: memref<1x128xf32, #tpu.memory_space<vmem>>, %arg6: memref<8x32xf32, #tpu.memory_space<vmem>>, %arg7: memref<8x32xf32, #tpu.memory_space<vmem>>, %arg8: memref<8x8x32xf32, #tpu.memory_space<vmem>>, %arg9: memref<8x32xf32, #tpu.memory_space<vmem>>, %arg10: memref<8x32xf32, #tpu.memory_space<vmem>>, %arg11: memref<8x32xf32, #tpu.memory_space<vmem>>, %arg12: memref<8x32xf32, #tpu.memory_space<vmem>>, %arg13: memref<8x8x128xf32, #tpu.memory_space<vmem>>) attributes {dimension_semantics = [#tpu.dimension_semantics<parallel>, #tpu.dimension_semantics<arbitrary>], iteration_bounds = array<i64: 1, 1>, scalar_prefetch = 0 : i64, scratch_operands = 3 : i64, tpu.core_type = #tpu.core_type<tc>, window_params = [{transform_indices = @transform_0, window_bounds = array<i64: 8, 8, 128>}, {pipeline_mode = #tpu.pipeline_mode<synchronous>, transform_indices = @transform_1, window_bounds = array<i64: 128, 128>}, {pipeline_mode = #tpu.pipeline_mode<synchronous>, transform_indices = @transform_2, window_bounds = array<i64: 32, 128>}, {pipeline_mode = #tpu.pipeline_mode<synchronous>, transform_indices = @transform_3, window_bounds = array<i64: 1, 128>}, {transform_indices = @transform_4, window_bounds = array<i64: 8, 32>}, {transform_indices = @transform_5, window_bounds = array<i64: 8, 32>}, {transform_indices = @transform_6, window_bounds = array<i64: 8, 8, 32>}, {transform_indices = @transform_7, window_bounds = array<i64: 8, 32>}, {transform_indices = @transform_8, window_bounds = array<i64: 8, 32>}]} {
    %c0_i32 = arith.constant 0 : i32
    %0 = arith.cmpi eq, %arg1, %c0_i32 : i32
    %1 = arith.extui %0 : i1 to i32
    %c0_i32_0 = arith.constant 0 : i32
    %2 = arith.cmpi ne, %1, %c0_i32_0 : i32
    scf.if %2 {
      %c0_101 = arith.constant 0 : index
      %c0_102 = arith.constant 0 : index
      %299 = vector.load %arg6[%c0_101, %c0_102] : memref<8x32xf32, #tpu.memory_space<vmem>>, vector<8x32xf32>
      %c0_103 = arith.constant 0 : index
      %c0_104 = arith.constant 0 : index
      %300 = vector.load %arg11[%c0_103, %c0_104] : memref<8x32xf32, #tpu.memory_space<vmem>>, vector<8x32xf32>
      tpu.vector_store %arg11[%c0_103, %c0_104], %299 {strides = array<i32>} : memref<8x32xf32, #tpu.memory_space<vmem>>, vector<8x32xf32>,
      %c0_105 = arith.constant 0 : index
      %c0_106 = arith.constant 0 : index
      %301 = vector.load %arg7[%c0_105, %c0_106] : memref<8x32xf32, #tpu.memory_space<vmem>>, vector<8x32xf32>
      %c0_107 = arith.constant 0 : index
      %c0_108 = arith.constant 0 : index
      %302 = vector.load %arg12[%c0_107, %c0_108] : memref<8x32xf32, #tpu.memory_space<vmem>>, vector<8x32xf32>
      tpu.vector_store %arg12[%c0_107, %c0_108], %301 {strides = array<i32>} : memref<8x32xf32, #tpu.memory_space<vmem>>, vector<8x32xf32>,
    } else {
    }
    %c0 = arith.constant 0 : index
    %c0_1 = arith.constant 0 : index
    %c0_2 = arith.constant 0 : index
    %3 = vector.load %arg2[%c0, %c0_1, %c0_2] : memref<8x8x128xf32, #tpu.memory_space<vmem>>, vector<8x8x128xf32>
    %4 = vector.shape_cast %3 : vector<8x8x128xf32> to vector<64x128xf32>
    %c0_3 = arith.constant 0 : index
    %c0_4 = arith.constant 0 : index
    %5 = vector.load %arg3[%c0_3, %c0_4] : memref<128x128xf32, #tpu.memory_space<vmem>>, vector<128x128xf32>
    %cst = arith.constant dense<0.000000e+00> : vector<64x128xf32>
    %6 = tpu.matmul %4, %5, %cst {dimension_numbers = #tpu.dot_dimension_numbers<[1], [0], [0], [1], [0, 0, 1, 1], [], []>} : vector<64x128xf32>, vector<128x128xf32>, vector<64x128xf32> -> vector<64x128xf32>
    %c0_5 = arith.constant 0 : index
    %c0_6 = arith.constant 0 : index
    %7 = vector.load %arg5[%c0_5, %c0_6] : memref<1x128xf32, #tpu.memory_space<vmem>>, vector<1x128xf32>
    %8 = vector.broadcast %7 : vector<1x128xf32> to vector<64x128xf32>
    %9 = arith.addf %6, %8 : vector<64x128xf32>
    %10 = vector.shape_cast %9 : vector<64x128xf32> to vector<8x8x128xf32>
    %c0_7 = arith.constant 0 : index
    %c0_8 = arith.constant 0 : index
    %c0_9 = arith.constant 0 : index
    %11 = vector.load %arg13[%c0_7, %c0_8, %c0_9] : memref<8x8x128xf32, #tpu.memory_space<vmem>>, vector<8x8x128xf32>
    tpu.vector_store %arg13[%c0_7, %c0_8, %c0_9], %10 {strides = array<i32>} : memref<8x8x128xf32, #tpu.memory_space<vmem>>, vector<8x8x128xf32>,
    %c0_10 = arith.constant 0 : index
    %c0_11 = arith.constant 0 : index
    %12 = vector.load %arg11[%c0_10, %c0_11] : memref<8x32xf32, #tpu.memory_space<vmem>>, vector<8x32xf32>
    %c0_12 = arith.constant 0 : index
    %c0_13 = arith.constant 0 : index
    %13 = vector.load %arg12[%c0_12, %c0_13] : memref<8x32xf32, #tpu.memory_space<vmem>>, vector<8x32xf32>
    %c0_i32_14 = arith.constant 0 : i32
    %14 = arith.index_cast %c0_i32_14 : i32 to index
    %c0_15 = arith.constant 0 : index
    %c0_16 = arith.constant 0 : index
    %15 = vector.load %arg13[%14, %c0_15, %c0_16] : memref<8x8x128xf32, #tpu.memory_space<vmem>>, vector<1x8x128xf32>
    %16 = vector.shape_cast %15 : vector<1x8x128xf32> to vector<8x128xf32>
    %c0_17 = arith.constant 0 : index
    %c0_18 = arith.constant 0 : index
    %17 = vector.load %arg4[%c0_17, %c0_18] : memref<32x128xf32, #tpu.memory_space<vmem>>, vector<32x128xf32>
    %cst_19 = arith.constant dense<0.000000e+00> : vector<8x128xf32>
    %18 = tpu.matmul %12, %17, %cst_19 {dimension_numbers = #tpu.dot_dimension_numbers<[1], [0], [0], [1], [0, 0, 1, 1], [], []>} : vector<8x32xf32>, vector<32x128xf32>, vector<8x128xf32> -> vector<8x128xf32>
    %19 = arith.addf %16, %18 : vector<8x128xf32>
    %20 = vector.extract_strided_slice %19 {offsets = [0, 0], sizes = [8, 32], strides = [1, 1]} : vector<8x128xf32> to vector<8x32xf32>
    %21 = arith.negf %20 : vector<8x32xf32>
    %22 = math.exp %21 : vector<8x32xf32>
    %cst_20 = arith.constant 1.000000e+00 : f32
    %23 = vector.broadcast %cst_20 : f32 to vector<8x32xf32>
    %24 = arith.addf %23, %22 : vector<8x32xf32>
    %25 = arith.divf %23, %24 : vector<8x32xf32>
    %26 = vector.extract_strided_slice %19 {offsets = [0, 32], sizes = [8, 32], strides = [1, 1]} : vector<8x128xf32> to vector<8x32xf32>
    %27 = arith.negf %26 : vector<8x32xf32>
    %28 = math.exp %27 : vector<8x32xf32>
    %cst_21 = arith.constant 1.000000e+00 : f32
    %29 = vector.broadcast %cst_21 : f32 to vector<8x32xf32>
    %30 = arith.addf %29, %28 : vector<8x32xf32>
    %31 = arith.divf %29, %30 : vector<8x32xf32>
    %32 = vector.extract_strided_slice %19 {offsets = [0, 64], sizes = [8, 32], strides = [1, 1]} : vector<8x128xf32> to vector<8x32xf32>
    %33 = math.tanh %32 : vector<8x32xf32>
    %34 = vector.extract_strided_slice %19 {offsets = [0, 96], sizes = [8, 32], strides = [1, 1]} : vector<8x128xf32> to vector<8x32xf32>
    %35 = arith.negf %34 : vector<8x32xf32>
    %36 = math.exp %35 : vector<8x32xf32>
    %cst_22 = arith.constant 1.000000e+00 : f32
    %37 = vector.broadcast %cst_22 : f32 to vector<8x32xf32>
    %38 = arith.addf %37, %36 : vector<8x32xf32>
    %39 = arith.divf %37, %38 : vector<8x32xf32>
    %40 = arith.mulf %31, %13 : vector<8x32xf32>
    %41 = arith.mulf %25, %33 : vector<8x32xf32>
    %42 = arith.addf %40, %41 : vector<8x32xf32>
    %43 = math.tanh %42 : vector<8x32xf32>
    %44 = arith.mulf %39, %43 : vector<8x32xf32>
    %45 = arith.index_cast %c0_i32_14 : i32 to index
    %c0_23 = arith.constant 0 : index
    %c0_24 = arith.constant 0 : index
    %46 = vector.load %arg8[%45, %c0_23, %c0_24] : memref<8x8x32xf32, #tpu.memory_space<vmem>>, vector<1x8x32xf32>
    %47 = vector.shape_cast %46 : vector<1x8x32xf32> to vector<8x32xf32>
    %48 = vector.shape_cast %44 : vector<8x32xf32> to vector<1x8x32xf32>
    tpu.vector_store %arg8[%45, %c0_23, %c0_24], %48 {strides = array<i32>} : memref<8x8x32xf32, #tpu.memory_space<vmem>>, vector<1x8x32xf32>,
    %c1_i32 = arith.constant 1 : i32
    %49 = arith.index_cast %c1_i32 : i32 to index
    %c0_25 = arith.constant 0 : index
    %c0_26 = arith.constant 0 : index
    %50 = vector.load %arg13[%49, %c0_25, %c0_26] : memref<8x8x128xf32, #tpu.memory_space<vmem>>, vector<1x8x128xf32>
    %51 = vector.shape_cast %50 : vector<1x8x128xf32> to vector<8x128xf32>
    %c0_27 = arith.constant 0 : index
    %c0_28 = arith.constant 0 : index
    %52 = vector.load %arg4[%c0_27, %c0_28] : memref<32x128xf32, #tpu.memory_space<vmem>>, vector<32x128xf32>
    %cst_29 = arith.constant dense<0.000000e+00> : vector<8x128xf32>
    %53 = tpu.matmul %44, %52, %cst_29 {dimension_numbers = #tpu.dot_dimension_numbers<[1], [0], [0], [1], [0, 0, 1, 1], [], []>} : vector<8x32xf32>, vector<32x128xf32>, vector<8x128xf32> -> vector<8x128xf32>
    %54 = arith.addf %51, %53 : vector<8x128xf32>
    %55 = vector.extract_strided_slice %54 {offsets = [0, 0], sizes = [8, 32], strides = [1, 1]} : vector<8x128xf32> to vector<8x32xf32>
    %56 = arith.negf %55 : vector<8x32xf32>
    %57 = math.exp %56 : vector<8x32xf32>
    %cst_30 = arith.constant 1.000000e+00 : f32
    %58 = vector.broadcast %cst_30 : f32 to vector<8x32xf32>
    %59 = arith.addf %58, %57 : vector<8x32xf32>
    %60 = arith.divf %58, %59 : vector<8x32xf32>
    %61 = vector.extract_strided_slice %54 {offsets = [0, 32], sizes = [8, 32], strides = [1, 1]} : vector<8x128xf32> to vector<8x32xf32>
    %62 = arith.negf %61 : vector<8x32xf32>
    %63 = math.exp %62 : vector<8x32xf32>
    %cst_31 = arith.constant 1.000000e+00 : f32
    %64 = vector.broadcast %cst_31 : f32 to vector<8x32xf32>
    %65 = arith.addf %64, %63 : vector<8x32xf32>
    %66 = arith.divf %64, %65 : vector<8x32xf32>
    %67 = vector.extract_strided_slice %54 {offsets = [0, 64], sizes = [8, 32], strides = [1, 1]} : vector<8x128xf32> to vector<8x32xf32>
    %68 = math.tanh %67 : vector<8x32xf32>
    %69 = vector.extract_strided_slice %54 {offsets = [0, 96], sizes = [8, 32], strides = [1, 1]} : vector<8x128xf32> to vector<8x32xf32>
    %70 = arith.negf %69 : vector<8x32xf32>
    %71 = math.exp %70 : vector<8x32xf32>
    %cst_32 = arith.constant 1.000000e+00 : f32
    %72 = vector.broadcast %cst_32 : f32 to vector<8x32xf32>
    %73 = arith.addf %72, %71 : vector<8x32xf32>
    %74 = arith.divf %72, %73 : vector<8x32xf32>
    %75 = arith.mulf %66, %42 : vector<8x32xf32>
    %76 = arith.mulf %60, %68 : vector<8x32xf32>
    %77 = arith.addf %75, %76 : vector<8x32xf32>
    %78 = math.tanh %77 : vector<8x32xf32>
    %79 = arith.mulf %74, %78 : vector<8x32xf32>
    %80 = arith.index_cast %c1_i32 : i32 to index
    %c0_33 = arith.constant 0 : index
    %c0_34 = arith.constant 0 : index
    %81 = vector.load %arg8[%80, %c0_33, %c0_34] : memref<8x8x32xf32, #tpu.memory_space<vmem>>, vector<1x8x32xf32>
    %82 = vector.shape_cast %81 : vector<1x8x32xf32> to vector<8x32xf32>
    %83 = vector.shape_cast %79 : vector<8x32xf32> to vector<1x8x32xf32>
    tpu.vector_store %arg8[%80, %c0_33, %c0_34], %83 {strides = array<i32>} : memref<8x8x32xf32, #tpu.memory_space<vmem>>, vector<1x8x32xf32>,
    %c2_i32 = arith.constant 2 : i32
    %84 = arith.index_cast %c2_i32 : i32 to index
    %c0_35 = arith.constant 0 : index
    %c0_36 = arith.constant 0 : index
    %85 = vector.load %arg13[%84, %c0_35, %c0_36] : memref<8x8x128xf32, #tpu.memory_space<vmem>>, vector<1x8x128xf32>
    %86 = vector.shape_cast %85 : vector<1x8x128xf32> to vector<8x128xf32>
    %c0_37 = arith.constant 0 : index
    %c0_38 = arith.constant 0 : index
    %87 = vector.load %arg4[%c0_37, %c0_38] : memref<32x128xf32, #tpu.memory_space<vmem>>, vector<32x128xf32>
    %cst_39 = arith.constant dense<0.000000e+00> : vector<8x128xf32>
    %88 = tpu.matmul %79, %87, %cst_39 {dimension_numbers = #tpu.dot_dimension_numbers<[1], [0], [0], [1], [0, 0, 1, 1], [], []>} : vector<8x32xf32>, vector<32x128xf32>, vector<8x128xf32> -> vector<8x128xf32>
    %89 = arith.addf %86, %88 : vector<8x128xf32>
    %90 = vector.extract_strided_slice %89 {offsets = [0, 0], sizes = [8, 32], strides = [1, 1]} : vector<8x128xf32> to vector<8x32xf32>
    %91 = arith.negf %90 : vector<8x32xf32>
    %92 = math.exp %91 : vector<8x32xf32>
    %cst_40 = arith.constant 1.000000e+00 : f32
    %93 = vector.broadcast %cst_40 : f32 to vector<8x32xf32>
    %94 = arith.addf %93, %92 : vector<8x32xf32>
    %95 = arith.divf %93, %94 : vector<8x32xf32>
    %96 = vector.extract_strided_slice %89 {offsets = [0, 32], sizes = [8, 32], strides = [1, 1]} : vector<8x128xf32> to vector<8x32xf32>
    %97 = arith.negf %96 : vector<8x32xf32>
    %98 = math.exp %97 : vector<8x32xf32>
    %cst_41 = arith.constant 1.000000e+00 : f32
    %99 = vector.broadcast %cst_41 : f32 to vector<8x32xf32>
    %100 = arith.addf %99, %98 : vector<8x32xf32>
    %101 = arith.divf %99, %100 : vector<8x32xf32>
    %102 = vector.extract_strided_slice %89 {offsets = [0, 64], sizes = [8, 32], strides = [1, 1]} : vector<8x128xf32> to vector<8x32xf32>
    %103 = math.tanh %102 : vector<8x32xf32>
    %104 = vector.extract_strided_slice %89 {offsets = [0, 96], sizes = [8, 32], strides = [1, 1]} : vector<8x128xf32> to vector<8x32xf32>
    %105 = arith.negf %104 : vector<8x32xf32>
    %106 = math.exp %105 : vector<8x32xf32>
    %cst_42 = arith.constant 1.000000e+00 : f32
    %107 = vector.broadcast %cst_42 : f32 to vector<8x32xf32>
    %108 = arith.addf %107, %106 : vector<8x32xf32>
    %109 = arith.divf %107, %108 : vector<8x32xf32>
    %110 = arith.mulf %101, %77 : vector<8x32xf32>
    %111 = arith.mulf %95, %103 : vector<8x32xf32>
    %112 = arith.addf %110, %111 : vector<8x32xf32>
    %113 = math.tanh %112 : vector<8x32xf32>
    %114 = arith.mulf %109, %113 : vector<8x32xf32>
    %115 = arith.index_cast %c2_i32 : i32 to index
    %c0_43 = arith.constant 0 : index
    %c0_44 = arith.constant 0 : index
    %116 = vector.load %arg8[%115, %c0_43, %c0_44] : memref<8x8x32xf32, #tpu.memory_space<vmem>>, vector<1x8x32xf32>
    %117 = vector.shape_cast %116 : vector<1x8x32xf32> to vector<8x32xf32>
    %118 = vector.shape_cast %114 : vector<8x32xf32> to vector<1x8x32xf32>
    tpu.vector_store %arg8[%115, %c0_43, %c0_44], %118 {strides = array<i32>} : memref<8x8x32xf32, #tpu.memory_space<vmem>>, vector<1x8x32xf32>,
    %c3_i32 = arith.constant 3 : i32
    %119 = arith.index_cast %c3_i32 : i32 to index
    %c0_45 = arith.constant 0 : index
    %c0_46 = arith.constant 0 : index
    %120 = vector.load %arg13[%119, %c0_45, %c0_46] : memref<8x8x128xf32, #tpu.memory_space<vmem>>, vector<1x8x128xf32>
    %121 = vector.shape_cast %120 : vector<1x8x128xf32> to vector<8x128xf32>
    %c0_47 = arith.constant 0 : index
    %c0_48 = arith.constant 0 : index
    %122 = vector.load %arg4[%c0_47, %c0_48] : memref<32x128xf32, #tpu.memory_space<vmem>>, vector<32x128xf32>
    %cst_49 = arith.constant dense<0.000000e+00> : vector<8x128xf32>
    %123 = tpu.matmul %114, %122, %cst_49 {dimension_numbers = #tpu.dot_dimension_numbers<[1], [0], [0], [1], [0, 0, 1, 1], [], []>} : vector<8x32xf32>, vector<32x128xf32>, vector<8x128xf32> -> vector<8x128xf32>
    %124 = arith.addf %121, %123 : vector<8x128xf32>
    %125 = vector.extract_strided_slice %124 {offsets = [0, 0], sizes = [8, 32], strides = [1, 1]} : vector<8x128xf32> to vector<8x32xf32>
    %126 = arith.negf %125 : vector<8x32xf32>
    %127 = math.exp %126 : vector<8x32xf32>
    %cst_50 = arith.constant 1.000000e+00 : f32
    %128 = vector.broadcast %cst_50 : f32 to vector<8x32xf32>
    %129 = arith.addf %128, %127 : vector<8x32xf32>
    %130 = arith.divf %128, %129 : vector<8x32xf32>
    %131 = vector.extract_strided_slice %124 {offsets = [0, 32], sizes = [8, 32], strides = [1, 1]} : vector<8x128xf32> to vector<8x32xf32>
    %132 = arith.negf %131 : vector<8x32xf32>
    %133 = math.exp %132 : vector<8x32xf32>
    %cst_51 = arith.constant 1.000000e+00 : f32
    %134 = vector.broadcast %cst_51 : f32 to vector<8x32xf32>
    %135 = arith.addf %134, %133 : vector<8x32xf32>
    %136 = arith.divf %134, %135 : vector<8x32xf32>
    %137 = vector.extract_strided_slice %124 {offsets = [0, 64], sizes = [8, 32], strides = [1, 1]} : vector<8x128xf32> to vector<8x32xf32>
    %138 = math.tanh %137 : vector<8x32xf32>
    %139 = vector.extract_strided_slice %124 {offsets = [0, 96], sizes = [8, 32], strides = [1, 1]} : vector<8x128xf32> to vector<8x32xf32>
    %140 = arith.negf %139 : vector<8x32xf32>
    %141 = math.exp %140 : vector<8x32xf32>
    %cst_52 = arith.constant 1.000000e+00 : f32
    %142 = vector.broadcast %cst_52 : f32 to vector<8x32xf32>
    %143 = arith.addf %142, %141 : vector<8x32xf32>
    %144 = arith.divf %142, %143 : vector<8x32xf32>
    %145 = arith.mulf %136, %112 : vector<8x32xf32>
    %146 = arith.mulf %130, %138 : vector<8x32xf32>
    %147 = arith.addf %145, %146 : vector<8x32xf32>
    %148 = math.tanh %147 : vector<8x32xf32>
    %149 = arith.mulf %144, %148 : vector<8x32xf32>
    %150 = arith.index_cast %c3_i32 : i32 to index
    %c0_53 = arith.constant 0 : index
    %c0_54 = arith.constant 0 : index
    %151 = vector.load %arg8[%150, %c0_53, %c0_54] : memref<8x8x32xf32, #tpu.memory_space<vmem>>, vector<1x8x32xf32>
    %152 = vector.shape_cast %151 : vector<1x8x32xf32> to vector<8x32xf32>
    %153 = vector.shape_cast %149 : vector<8x32xf32> to vector<1x8x32xf32>
    tpu.vector_store %arg8[%150, %c0_53, %c0_54], %153 {strides = array<i32>} : memref<8x8x32xf32, #tpu.memory_space<vmem>>, vector<1x8x32xf32>,
    %c4_i32 = arith.constant 4 : i32
    %154 = arith.index_cast %c4_i32 : i32 to index
    %c0_55 = arith.constant 0 : index
    %c0_56 = arith.constant 0 : index
    %155 = vector.load %arg13[%154, %c0_55, %c0_56] : memref<8x8x128xf32, #tpu.memory_space<vmem>>, vector<1x8x128xf32>
    %156 = vector.shape_cast %155 : vector<1x8x128xf32> to vector<8x128xf32>
    %c0_57 = arith.constant 0 : index
    %c0_58 = arith.constant 0 : index
    %157 = vector.load %arg4[%c0_57, %c0_58] : memref<32x128xf32, #tpu.memory_space<vmem>>, vector<32x128xf32>
    %cst_59 = arith.constant dense<0.000000e+00> : vector<8x128xf32>
    %158 = tpu.matmul %149, %157, %cst_59 {dimension_numbers = #tpu.dot_dimension_numbers<[1], [0], [0], [1], [0, 0, 1, 1], [], []>} : vector<8x32xf32>, vector<32x128xf32>, vector<8x128xf32> -> vector<8x128xf32>
    %159 = arith.addf %156, %158 : vector<8x128xf32>
    %160 = vector.extract_strided_slice %159 {offsets = [0, 0], sizes = [8, 32], strides = [1, 1]} : vector<8x128xf32> to vector<8x32xf32>
    %161 = arith.negf %160 : vector<8x32xf32>
    %162 = math.exp %161 : vector<8x32xf32>
    %cst_60 = arith.constant 1.000000e+00 : f32
    %163 = vector.broadcast %cst_60 : f32 to vector<8x32xf32>
    %164 = arith.addf %163, %162 : vector<8x32xf32>
    %165 = arith.divf %163, %164 : vector<8x32xf32>
    %166 = vector.extract_strided_slice %159 {offsets = [0, 32], sizes = [8, 32], strides = [1, 1]} : vector<8x128xf32> to vector<8x32xf32>
    %167 = arith.negf %166 : vector<8x32xf32>
    %168 = math.exp %167 : vector<8x32xf32>
    %cst_61 = arith.constant 1.000000e+00 : f32
    %169 = vector.broadcast %cst_61 : f32 to vector<8x32xf32>
    %170 = arith.addf %169, %168 : vector<8x32xf32>
    %171 = arith.divf %169, %170 : vector<8x32xf32>
    %172 = vector.extract_strided_slice %159 {offsets = [0, 64], sizes = [8, 32], strides = [1, 1]} : vector<8x128xf32> to vector<8x32xf32>
    %173 = math.tanh %172 : vector<8x32xf32>
    %174 = vector.extract_strided_slice %159 {offsets = [0, 96], sizes = [8, 32], strides = [1, 1]} : vector<8x128xf32> to vector<8x32xf32>
    %175 = arith.negf %174 : vector<8x32xf32>
    %176 = math.exp %175 : vector<8x32xf32>
    %cst_62 = arith.constant 1.000000e+00 : f32
    %177 = vector.broadcast %cst_62 : f32 to vector<8x32xf32>
    %178 = arith.addf %177, %176 : vector<8x32xf32>
    %179 = arith.divf %177, %178 : vector<8x32xf32>
    %180 = arith.mulf %171, %147 : vector<8x32xf32>
    %181 = arith.mulf %165, %173 : vector<8x32xf32>
    %182 = arith.addf %180, %181 : vector<8x32xf32>
    %183 = math.tanh %182 : vector<8x32xf32>
    %184 = arith.mulf %179, %183 : vector<8x32xf32>
    %185 = arith.index_cast %c4_i32 : i32 to index
    %c0_63 = arith.constant 0 : index
    %c0_64 = arith.constant 0 : index
    %186 = vector.load %arg8[%185, %c0_63, %c0_64] : memref<8x8x32xf32, #tpu.memory_space<vmem>>, vector<1x8x32xf32>
    %187 = vector.shape_cast %186 : vector<1x8x32xf32> to vector<8x32xf32>
    %188 = vector.shape_cast %184 : vector<8x32xf32> to vector<1x8x32xf32>
    tpu.vector_store %arg8[%185, %c0_63, %c0_64], %188 {strides = array<i32>} : memref<8x8x32xf32, #tpu.memory_space<vmem>>, vector<1x8x32xf32>,
    %c5_i32 = arith.constant 5 : i32
    %189 = arith.index_cast %c5_i32 : i32 to index
    %c0_65 = arith.constant 0 : index
    %c0_66 = arith.constant 0 : index
    %190 = vector.load %arg13[%189, %c0_65, %c0_66] : memref<8x8x128xf32, #tpu.memory_space<vmem>>, vector<1x8x128xf32>
    %191 = vector.shape_cast %190 : vector<1x8x128xf32> to vector<8x128xf32>
    %c0_67 = arith.constant 0 : index
    %c0_68 = arith.constant 0 : index
    %192 = vector.load %arg4[%c0_67, %c0_68] : memref<32x128xf32, #tpu.memory_space<vmem>>, vector<32x128xf32>
    %cst_69 = arith.constant dense<0.000000e+00> : vector<8x128xf32>
    %193 = tpu.matmul %184, %192, %cst_69 {dimension_numbers = #tpu.dot_dimension_numbers<[1], [0], [0], [1], [0, 0, 1, 1], [], []>} : vector<8x32xf32>, vector<32x128xf32>, vector<8x128xf32> -> vector<8x128xf32>
    %194 = arith.addf %191, %193 : vector<8x128xf32>
    %195 = vector.extract_strided_slice %194 {offsets = [0, 0], sizes = [8, 32], strides = [1, 1]} : vector<8x128xf32> to vector<8x32xf32>
    %196 = arith.negf %195 : vector<8x32xf32>
    %197 = math.exp %196 : vector<8x32xf32>
    %cst_70 = arith.constant 1.000000e+00 : f32
    %198 = vector.broadcast %cst_70 : f32 to vector<8x32xf32>
    %199 = arith.addf %198, %197 : vector<8x32xf32>
    %200 = arith.divf %198, %199 : vector<8x32xf32>
    %201 = vector.extract_strided_slice %194 {offsets = [0, 32], sizes = [8, 32], strides = [1, 1]} : vector<8x128xf32> to vector<8x32xf32>
    %202 = arith.negf %201 : vector<8x32xf32>
    %203 = math.exp %202 : vector<8x32xf32>
    %cst_71 = arith.constant 1.000000e+00 : f32
    %204 = vector.broadcast %cst_71 : f32 to vector<8x32xf32>
    %205 = arith.addf %204, %203 : vector<8x32xf32>
    %206 = arith.divf %204, %205 : vector<8x32xf32>
    %207 = vector.extract_strided_slice %194 {offsets = [0, 64], sizes = [8, 32], strides = [1, 1]} : vector<8x128xf32> to vector<8x32xf32>
    %208 = math.tanh %207 : vector<8x32xf32>
    %209 = vector.extract_strided_slice %194 {offsets = [0, 96], sizes = [8, 32], strides = [1, 1]} : vector<8x128xf32> to vector<8x32xf32>
    %210 = arith.negf %209 : vector<8x32xf32>
    %211 = math.exp %210 : vector<8x32xf32>
    %cst_72 = arith.constant 1.000000e+00 : f32
    %212 = vector.broadcast %cst_72 : f32 to vector<8x32xf32>
    %213 = arith.addf %212, %211 : vector<8x32xf32>
    %214 = arith.divf %212, %213 : vector<8x32xf32>
    %215 = arith.mulf %206, %182 : vector<8x32xf32>
    %216 = arith.mulf %200, %208 : vector<8x32xf32>
    %217 = arith.addf %215, %216 : vector<8x32xf32>
    %218 = math.tanh %217 : vector<8x32xf32>
    %219 = arith.mulf %214, %218 : vector<8x32xf32>
    %220 = arith.index_cast %c5_i32 : i32 to index
    %c0_73 = arith.constant 0 : index
    %c0_74 = arith.constant 0 : index
    %221 = vector.load %arg8[%220, %c0_73, %c0_74] : memref<8x8x32xf32, #tpu.memory_space<vmem>>, vector<1x8x32xf32>
    %222 = vector.shape_cast %221 : vector<1x8x32xf32> to vector<8x32xf32>
    %223 = vector.shape_cast %219 : vector<8x32xf32> to vector<1x8x32xf32>
    tpu.vector_store %arg8[%220, %c0_73, %c0_74], %223 {strides = array<i32>} : memref<8x8x32xf32, #tpu.memory_space<vmem>>, vector<1x8x32xf32>,
    %c6_i32 = arith.constant 6 : i32
    %224 = arith.index_cast %c6_i32 : i32 to index
    %c0_75 = arith.constant 0 : index
    %c0_76 = arith.constant 0 : index
    %225 = vector.load %arg13[%224, %c0_75, %c0_76] : memref<8x8x128xf32, #tpu.memory_space<vmem>>, vector<1x8x128xf32>
    %226 = vector.shape_cast %225 : vector<1x8x128xf32> to vector<8x128xf32>
    %c0_77 = arith.constant 0 : index
    %c0_78 = arith.constant 0 : index
    %227 = vector.load %arg4[%c0_77, %c0_78] : memref<32x128xf32, #tpu.memory_space<vmem>>, vector<32x128xf32>
    %cst_79 = arith.constant dense<0.000000e+00> : vector<8x128xf32>
    %228 = tpu.matmul %219, %227, %cst_79 {dimension_numbers = #tpu.dot_dimension_numbers<[1], [0], [0], [1], [0, 0, 1, 1], [], []>} : vector<8x32xf32>, vector<32x128xf32>, vector<8x128xf32> -> vector<8x128xf32>
    %229 = arith.addf %226, %228 : vector<8x128xf32>
    %230 = vector.extract_strided_slice %229 {offsets = [0, 0], sizes = [8, 32], strides = [1, 1]} : vector<8x128xf32> to vector<8x32xf32>
    %231 = arith.negf %230 : vector<8x32xf32>
    %232 = math.exp %231 : vector<8x32xf32>
    %cst_80 = arith.constant 1.000000e+00 : f32
    %233 = vector.broadcast %cst_80 : f32 to vector<8x32xf32>
    %234 = arith.addf %233, %232 : vector<8x32xf32>
    %235 = arith.divf %233, %234 : vector<8x32xf32>
    %236 = vector.extract_strided_slice %229 {offsets = [0, 32], sizes = [8, 32], strides = [1, 1]} : vector<8x128xf32> to vector<8x32xf32>
    %237 = arith.negf %236 : vector<8x32xf32>
    %238 = math.exp %237 : vector<8x32xf32>
    %cst_81 = arith.constant 1.000000e+00 : f32
    %239 = vector.broadcast %cst_81 : f32 to vector<8x32xf32>
    %240 = arith.addf %239, %238 : vector<8x32xf32>
    %241 = arith.divf %239, %240 : vector<8x32xf32>
    %242 = vector.extract_strided_slice %229 {offsets = [0, 64], sizes = [8, 32], strides = [1, 1]} : vector<8x128xf32> to vector<8x32xf32>
    %243 = math.tanh %242 : vector<8x32xf32>
    %244 = vector.extract_strided_slice %229 {offsets = [0, 96], sizes = [8, 32], strides = [1, 1]} : vector<8x128xf32> to vector<8x32xf32>
    %245 = arith.negf %244 : vector<8x32xf32>
    %246 = math.exp %245 : vector<8x32xf32>
    %cst_82 = arith.constant 1.000000e+00 : f32
    %247 = vector.broadcast %cst_82 : f32 to vector<8x32xf32>
    %248 = arith.addf %247, %246 : vector<8x32xf32>
    %249 = arith.divf %247, %248 : vector<8x32xf32>
    %250 = arith.mulf %241, %217 : vector<8x32xf32>
    %251 = arith.mulf %235, %243 : vector<8x32xf32>
    %252 = arith.addf %250, %251 : vector<8x32xf32>
    %253 = math.tanh %252 : vector<8x32xf32>
    %254 = arith.mulf %249, %253 : vector<8x32xf32>
    %255 = arith.index_cast %c6_i32 : i32 to index
    %c0_83 = arith.constant 0 : index
    %c0_84 = arith.constant 0 : index
    %256 = vector.load %arg8[%255, %c0_83, %c0_84] : memref<8x8x32xf32, #tpu.memory_space<vmem>>, vector<1x8x32xf32>
    %257 = vector.shape_cast %256 : vector<1x8x32xf32> to vector<8x32xf32>
    %258 = vector.shape_cast %254 : vector<8x32xf32> to vector<1x8x32xf32>
    tpu.vector_store %arg8[%255, %c0_83, %c0_84], %258 {strides = array<i32>} : memref<8x8x32xf32, #tpu.memory_space<vmem>>, vector<1x8x32xf32>,
    %c7_i32 = arith.constant 7 : i32
    %259 = arith.index_cast %c7_i32 : i32 to index
    %c0_85 = arith.constant 0 : index
    %c0_86 = arith.constant 0 : index
    %260 = vector.load %arg13[%259, %c0_85, %c0_86] : memref<8x8x128xf32, #tpu.memory_space<vmem>>, vector<1x8x128xf32>
    %261 = vector.shape_cast %260 : vector<1x8x128xf32> to vector<8x128xf32>
    %c0_87 = arith.constant 0 : index
    %c0_88 = arith.constant 0 : index
    %262 = vector.load %arg4[%c0_87, %c0_88] : memref<32x128xf32, #tpu.memory_space<vmem>>, vector<32x128xf32>
    %cst_89 = arith.constant dense<0.000000e+00> : vector<8x128xf32>
    %263 = tpu.matmul %254, %262, %cst_89 {dimension_numbers = #tpu.dot_dimension_numbers<[1], [0], [0], [1], [0, 0, 1, 1], [], []>} : vector<8x32xf32>, vector<32x128xf32>, vector<8x128xf32> -> vector<8x128xf32>
    %264 = arith.addf %261, %263 : vector<8x128xf32>
    %265 = vector.extract_strided_slice %264 {offsets = [0, 0], sizes = [8, 32], strides = [1, 1]} : vector<8x128xf32> to vector<8x32xf32>
    %266 = arith.negf %265 : vector<8x32xf32>
    %267 = math.exp %266 : vector<8x32xf32>
    %cst_90 = arith.constant 1.000000e+00 : f32
    %268 = vector.broadcast %cst_90 : f32 to vector<8x32xf32>
    %269 = arith.addf %268, %267 : vector<8x32xf32>
    %270 = arith.divf %268, %269 : vector<8x32xf32>
    %271 = vector.extract_strided_slice %264 {offsets = [0, 32], sizes = [8, 32], strides = [1, 1]} : vector<8x128xf32> to vector<8x32xf32>
    %272 = arith.negf %271 : vector<8x32xf32>
    %273 = math.exp %272 : vector<8x32xf32>
    %cst_91 = arith.constant 1.000000e+00 : f32
    %274 = vector.broadcast %cst_91 : f32 to vector<8x32xf32>
    %275 = arith.addf %274, %273 : vector<8x32xf32>
    %276 = arith.divf %274, %275 : vector<8x32xf32>
    %277 = vector.extract_strided_slice %264 {offsets = [0, 64], sizes = [8, 32], strides = [1, 1]} : vector<8x128xf32> to vector<8x32xf32>
    %278 = math.tanh %277 : vector<8x32xf32>
    %279 = vector.extract_strided_slice %264 {offsets = [0, 96], sizes = [8, 32], strides = [1, 1]} : vector<8x128xf32> to vector<8x32xf32>
    %280 = arith.negf %279 : vector<8x32xf32>
    %281 = math.exp %280 : vector<8x32xf32>
    %cst_92 = arith.constant 1.000000e+00 : f32
    %282 = vector.broadcast %cst_92 : f32 to vector<8x32xf32>
    %283 = arith.addf %282, %281 : vector<8x32xf32>
    %284 = arith.divf %282, %283 : vector<8x32xf32>
    %285 = arith.mulf %276, %252 : vector<8x32xf32>
    %286 = arith.mulf %270, %278 : vector<8x32xf32>
    %287 = arith.addf %285, %286 : vector<8x32xf32>
    %288 = math.tanh %287 : vector<8x32xf32>
    %289 = arith.mulf %284, %288 : vector<8x32xf32>
    %290 = arith.index_cast %c7_i32 : i32 to index
    %c0_93 = arith.constant 0 : index
    %c0_94 = arith.constant 0 : index
    %291 = vector.load %arg8[%290, %c0_93, %c0_94] : memref<8x8x32xf32, #tpu.memory_space<vmem>>, vector<1x8x32xf32>
    %292 = vector.shape_cast %291 : vector<1x8x32xf32> to vector<8x32xf32>
    %293 = vector.shape_cast %289 : vector<8x32xf32> to vector<1x8x32xf32>
    tpu.vector_store %arg8[%290, %c0_93, %c0_94], %293 {strides = array<i32>} : memref<8x8x32xf32, #tpu.memory_space<vmem>>, vector<1x8x32xf32>,
    %c8_i32 = arith.constant 8 : i32
    %c0_95 = arith.constant 0 : index
    %c0_96 = arith.constant 0 : index
    %294 = vector.load %arg11[%c0_95, %c0_96] : memref<8x32xf32, #tpu.memory_space<vmem>>, vector<8x32xf32>
    tpu.vector_store %arg11[%c0_95, %c0_96], %289 {strides = array<i32>} : memref<8x32xf32, #tpu.memory_space<vmem>>, vector<8x32xf32>,
    %c0_97 = arith.constant 0 : index
    %c0_98 = arith.constant 0 : index
    %295 = vector.load %arg12[%c0_97, %c0_98] : memref<8x32xf32, #tpu.memory_space<vmem>>, vector<8x32xf32>
    tpu.vector_store %arg12[%c0_97, %c0_98], %287 {strides = array<i32>} : memref<8x32xf32, #tpu.memory_space<vmem>>, vector<8x32xf32>,
    %c0_i32_99 = arith.constant 0 : i32
    %296 = arith.cmpi eq, %arg1, %c0_i32_99 : i32
    %297 = arith.extui %296 : i1 to i32
    %c0_i32_100 = arith.constant 0 : i32
    %298 = arith.cmpi ne, %297, %c0_i32_100 : i32
    scf.if %298 {
      %c0_101 = arith.constant 0 : index
      %c0_102 = arith.constant 0 : index
      %299 = vector.load %arg9[%c0_101, %c0_102] : memref<8x32xf32, #tpu.memory_space<vmem>>, vector<8x32xf32>
      tpu.vector_store %arg9[%c0_101, %c0_102], %289 {strides = array<i32>} : memref<8x32xf32, #tpu.memory_space<vmem>>, vector<8x32xf32>,
      %c0_103 = arith.constant 0 : index
      %c0_104 = arith.constant 0 : index
      %300 = vector.load %arg10[%c0_103, %c0_104] : memref<8x32xf32, #tpu.memory_space<vmem>>, vector<8x32xf32>
      tpu.vector_store %arg10[%c0_103, %c0_104], %287 {strides = array<i32>} : memref<8x32xf32, #tpu.memory_space<vmem>>, vector<8x32xf32>,
    } else {
    }
    return
  }
  func.func @transform_0(%arg0: i32, %arg1: i32) -> (i32, i32, i32) {
    %c0_i32 = arith.constant 0 : i32
    %c0_i32_0 = arith.constant 0 : i32
    return %arg1, %arg0, %c0_i32 : i32, i32, i32
  }
  func.func @transform_1(%arg0: i32, %arg1: i32) -> (i32, i32) {
    %c0_i32 = arith.constant 0 : i32
    %c0_i32_0 = arith.constant 0 : i32
    %c0_i32_1 = arith.constant 0 : i32
    return %c0_i32, %c0_i32_0 : i32, i32
  }
  func.func @transform_2(%arg0: i32, %arg1: i32) -> (i32, i32) {
    %c0_i32 = arith.constant 0 : i32
    %c0_i32_0 = arith.constant 0 : i32
    %c0_i32_1 = arith.constant 0 : i32
    return %c0_i32, %c0_i32_0 : i32, i32
  }
  func.func @transform_3(%arg0: i32, %arg1: i32) -> (i32, i32) {
    %c0_i32 = arith.constant 0 : i32
    %c0_i32_0 = arith.constant 0 : i32
    %c0_i32_1 = arith.constant 0 : i32
    return %c0_i32, %c0_i32_0 : i32, i32
  }
  func.func @transform_4(%arg0: i32, %arg1: i32) -> (i32, i32) {
    %c0_i32 = arith.constant 0 : i32
    %c0_i32_0 = arith.constant 0 : i32
    return %arg0, %c0_i32 : i32, i32
  }
  func.func @transform_5(%arg0: i32, %arg1: i32) -> (i32, i32) {
    %c0_i32 = arith.constant 0 : i32
    %c0_i32_0 = arith.constant 0 : i32
    return %arg0, %c0_i32 : i32, i32
  }
  func.func @transform_6(%arg0: i32, %arg1: i32) -> (i32, i32, i32) {
    %c0_i32 = arith.constant 0 : i32
    %c0_i32_0 = arith.constant 0 : i32
    return %arg1, %arg0, %c0_i32 : i32, i32, i32
  }
  func.func @transform_7(%arg0: i32, %arg1: i32) -> (i32, i32) {
    %c0_i32 = arith.constant 0 : i32
    %c0_i32_0 = arith.constant 0 : i32
    return %arg0, %c0_i32 : i32, i32
  }
  func.func @transform_8(%arg0: i32, %arg1: i32) -> (i32, i32) {
    %c0_i32 = arith.constant 0 : i32
    %c0_i32_0 = arith.constant 0 : i32
    return %arg0, %c0_i32 : i32, i32
  }
}

</mosaic_0001>

<llo_original>
// kernel: tpu_custom_call.1
$region0: #{tpu_custom_call.1}
  #allocation0 [shape = 'u32[]', space=smem, size = 0x4, offset = 0x4, fixed_abs, tag = 'smem constant byte address 0x4 - core index']
  #allocation1 [shape = 'u32[144,128]{1,0:T(1,128)}', space=vmem, size = 0x12000, scoped, tag = 'internal scratch']
  #allocation2 [shape = 'f32[8,32]{1,0:T(8,128)}', space=vmem, size = 0x1000, scoped, tag = 'scratch operand']
  #allocation3 [shape = 'f32[8,32]{1,0:T(8,128)}', space=vmem, size = 0x1000, scoped, tag = 'scratch operand']
  #allocation4 [shape = 'f32[8,8,128]{2,1,0:T(8,128)}', space=vmem, size = 0x8000, scoped, tag = 'scratch operand']
  %s0 = inlined_call_operand.hbm [shape: f32[8,8,128], index: 0, kind: input, shape index: {}]
  %s1 = inlined_call_operand.hbm [shape: f32[128,128], index: 1, kind: input, shape index: {}]
  %s2 = inlined_call_operand.hbm [shape: f32[32,128], index: 2, kind: input, shape index: {}]
  %s3 = inlined_call_operand.hbm [shape: f32[1,128], index: 3, kind: input, shape index: {}]
  %s4 = inlined_call_operand.hbm [shape: f32[8,32], index: 4, kind: input, shape index: {}]
  %s5 = inlined_call_operand.hbm [shape: f32[8,32], index: 5, kind: input, shape index: {}]
  %s6 = inlined_call_operand.hbm [shape: f32[8,8,32], index: 6, kind: output, shape index: {0}]
  %s7 = inlined_call_operand.hbm [shape: f32[8,32], index: 7, kind: output, shape index: {1}]
  %s8 = inlined_call_operand.hbm [shape: f32[8,32], index: 8, kind: output, shape index: {2}]
  %9 = xla_tuple %s6, %s7, %s8
  %s10 = sld [smem:[#allocation0]]
  $region82: #{tpu_custom_call.1} parent=0
    _
  %s12 = ssub.s32 1, %s10
  %s13 = scalar_select 0, %s12, %s10
  $region1: #{tpu_custom_call.1} parent=0
    #allocation5 [shape = 'u8[32768]{0}', space=vmem, size = 0x8000, scoped, tag = 'input window, operand 0, single buffered']
    #allocation6 [shape = 's32[1]{0}', space=sflag, size = 0x4, scoped, tag = 'scoped memory for tpu_custom_call.1']
    #allocation7 [shape = 's32[1]{0}', space=sflag, size = 0x4, scoped, tag = 'scoped memory for tpu_custom_call.1']
    #allocation8 [shape = 'u8[65536]{0}', space=vmem, size = 0x10000, scoped, tag = 'input window, operand 1, single buffered']
    #allocation9 [shape = 's32[1]{0}', space=sflag, size = 0x4, scoped, tag = 'scoped memory for tpu_custom_call.1']
    #allocation10 [shape = 'u8[16384]{0}', space=vmem, size = 0x4000, scoped, tag = 'input window, operand 2, single buffered']
    #allocation11 [shape = 'u8[512]{0}', space=vmem, size = 0x400, scoped, tag = 'input window, operand 3, single buffered']
    #allocation12 [shape = 's32[1]{0}', space=sflag, size = 0x4, scoped, tag = 'scoped memory for tpu_custom_call.1']
    #allocation13 [shape = 'u8[4096]{0}', space=vmem, size = 0x1000, scoped, tag = 'input window, operand 4, single buffered']
    #allocation14 [shape = 'u8[4096]{0}', space=vmem, size = 0x1000, scoped, tag = 'input window, operand 5, single buffered']
    #allocation15 [shape = 's32[1]{0}', space=sflag, size = 0x4, scoped, tag = 'scoped memory for tpu_custom_call.1']
    #allocation16 [shape = 'u8[32768]{0}', space=vmem, size = 0x8000, scoped, tag = 'output window, operand 0, single buffered']
    #allocation17 [shape = 'u8[4096]{0}', space=vmem, size = 0x1000, scoped, tag = 'output window, operand 1, single buffered']
    #allocation18 [shape = 's32[1]{0}', space=sflag, size = 0x4, scoped, tag = 'scoped memory for tpu_custom_call.1']
    #allocation19 [shape = 'u8[4096]{0}', space=vmem, size = 0x1000, scoped, tag = 'output window, operand 2, single buffered']
    %14 = vsyncpa [#allocation6], 0
    %15 = vsyncpa [#allocation9], 0
    %16 = vsyncpa [#allocation12], 0
    %17 = vsyncpa [#allocation15], 0
    %18 = vsyncpa [#allocation7], 0
    %19 = vsyncpa [#allocation18], 0
    // Predicated region
    $region2: #{tpu_custom_call.1} parent=1 // pred_check
      _
    $region3: #{tpu_custom_call.1} parent=1 // pred_check_branch
      %21 = sbr.rel (0) target = $region5
    $region4: #{tpu_custom_call.1} parent=1 // pred_region
      %s23 = ssub.s32 1024, 1024
      %24 = vsyncadd [#allocation6], %s23
      %s25 = sshll.u32 [#allocation5], 4
      %s26 = int_to_ptr.vmem [resolvable:$true] %s25
      %31 = dma.hbm_to_vmem [thread:$0]  %s0, 1024, %s26, [#allocation6], 128, 128, 8
    $region5: #{tpu_custom_call.1} parent=1 // pred_fallthru
      _
    // Predicated region
    $region6: #{tpu_custom_call.1} parent=1 // pred_check
      _
    $region7: #{tpu_custom_call.1} parent=1 // pred_check_branch
      %33 = sbr.rel (0) target = $region9
    $region8: #{tpu_custom_call.1} parent=1 // pred_region
      %s35 = ssub.s32 2048, 2048
      %36 = vsyncadd [#allocation9], %s35
      %s37 = sshll.u32 [#allocation8], 4
      %s38 = int_to_ptr.vmem [resolvable:$true] %s37
      %43 = dma.hbm_to_vmem [thread:$0]  %s1, 2048, %s38, [#allocation9], 128, 128, 8
    $region9: #{tpu_custom_call.1} parent=1 // pred_fallthru
      _
    // Predicated region
    $region10: #{tpu_custom_call.1} parent=1 // pred_check
      _
    $region11: #{tpu_custom_call.1} parent=1 // pred_check_branch
      %45 = sbr.rel (0) target = $region13
    $region12: #{tpu_custom_call.1} parent=1 // pred_region
      %s47 = ssub.s32 512, 512
      %48 = vsyncadd [#allocation9], %s47
      %s49 = sshll.u32 [#allocation10], 4
      %s50 = int_to_ptr.vmem [resolvable:$true] %s49
      %55 = dma.hbm_to_vmem [thread:$0]  %s2, 512, %s50, [#allocation9], 128, 128, 8
    $region13: #{tpu_custom_call.1} parent=1 // pred_fallthru
      _
    // Predicated region
    $region14: #{tpu_custom_call.1} parent=1 // pred_check
      _
    $region15: #{tpu_custom_call.1} parent=1 // pred_check_branch
      %57 = sbr.rel (0) target = $region17
    $region16: #{tpu_custom_call.1} parent=1 // pred_region
      %s59 = ssub.s32 16, 16
      %60 = vsyncadd [#allocation12], %s59
      %s62 = sshll.u32 [#allocation11], 4
      %s63 = int_to_ptr.vmem [resolvable:$true] %s62
      %65 = dma.hbm_to_vmem [thread:$0]  %s3, 16, %s63, [#allocation12]
    $region17: #{tpu_custom_call.1} parent=1 // pred_fallthru
      _
    // Predicated region
    $region18: #{tpu_custom_call.1} parent=1 // pred_check
      _
    $region19: #{tpu_custom_call.1} parent=1 // pred_check_branch
      %67 = sbr.rel (0) target = $region21
    $region20: #{tpu_custom_call.1} parent=1 // pred_region
      %s69 = ssub.s32 128, 128
      %70 = vsyncadd [#allocation12], %s69
      %s72 = sshll.u32 [#allocation13], 4
      %s73 = int_to_ptr.vmem [resolvable:$true] %s72
      %75 = dma.hbm_to_vmem [thread:$0]  %s4, 128, %s73, [#allocation12]
    $region21: #{tpu_custom_call.1} parent=1 // pred_fallthru
      _
    // Predicated region
    $region22: #{tpu_custom_call.1} parent=1 // pred_check
      _
    $region23: #{tpu_custom_call.1} parent=1 // pred_check_branch
      %77 = sbr.rel (0) target = $region25
    $region24: #{tpu_custom_call.1} parent=1 // pred_region
      %s79 = ssub.s32 128, 128
      %80 = vsyncadd [#allocation15], %s79
      %s82 = sshll.u32 [#allocation14], 4
      %s83 = int_to_ptr.vmem [resolvable:$true] %s82
      %85 = dma.hbm_to_vmem [thread:$0]  %s5, 128, %s83, [#allocation15]
    $region25: #{tpu_custom_call.1} parent=1 // pred_fallthru
      _
    // Predicated region
    $region26: #{tpu_custom_call.1} parent=1 // pred_check
      _
    $region27: #{tpu_custom_call.1} parent=1 // pred_check_branch
      %87 = sbr.rel (0) target = $region29
    $region28: #{tpu_custom_call.1} parent=1 // pred_region
      %88 = dma.done [#allocation6], 1024
    $region29: #{tpu_custom_call.1} parent=1 // pred_fallthru
      _
    // Predicated region
    $region30: #{tpu_custom_call.1} parent=1 // pred_check
      _
    $region31: #{tpu_custom_call.1} parent=1 // pred_check_branch
      %90 = sbr.rel (0) target = $region33
    $region32: #{tpu_custom_call.1} parent=1 // pred_region
      %91 = dma.done [#allocation9], 2048
    $region33: #{tpu_custom_call.1} parent=1 // pred_fallthru
      _
    // Predicated region
    $region34: #{tpu_custom_call.1} parent=1 // pred_check
      _
    $region35: #{tpu_custom_call.1} parent=1 // pred_check_branch
      %93 = sbr.rel (0) target = $region37
    $region36: #{tpu_custom_call.1} parent=1 // pred_region
      %94 = dma.done [#allocation9], 512
    $region37: #{tpu_custom_call.1} parent=1 // pred_fallthru
      _
    // Predicated region
    $region38: #{tpu_custom_call.1} parent=1 // pred_check
      _
    $region39: #{tpu_custom_call.1} parent=1 // pred_check_branch
      %96 = sbr.rel (0) target = $region41
    $region40: #{tpu_custom_call.1} parent=1 // pred_region
      %97 = dma.done [#allocation12], 16
    $region41: #{tpu_custom_call.1} parent=1 // pred_fallthru
      _
    // Predicated region
    $region42: #{tpu_custom_call.1} parent=1 // pred_check
      _
    $region43: #{tpu_custom_call.1} parent=1 // pred_check_branch
      %99 = sbr.rel (0) target = $region45
    $region44: #{tpu_custom_call.1} parent=1 // pred_region
      %100 = dma.done [#allocation12], 128
    $region45: #{tpu_custom_call.1} parent=1 // pred_fallthru
      _
    // Predicated region
    $region46: #{tpu_custom_call.1} parent=1 // pred_check
      _
    $region47: #{tpu_custom_call.1} parent=1 // pred_check_branch
      %102 = sbr.rel (0) target = $region49
    $region48: #{tpu_custom_call.1} parent=1 // pred_region
      %103 = dma.done [#allocation15], 128
    $region49: #{tpu_custom_call.1} parent=1 // pred_fallthru
      _
    %p104 = scmp.eq.s32.totalorder 0, 0
    // Predicated region
    $region50: #{tpu_custom_call.1} parent=1 // pred_check
      %p105 = pneg %p104
    $region51: #{tpu_custom_call.1} parent=1 // pred_check_branch
      %107 = sbr.rel (%p105) target = $region53
    $region52: #{tpu_custom_call.1} parent=1 // pred_region
      %v108 = vld [vmem:[#allocation13] sm:$0xff]
      %vm109 = vcmask 261120
      %110 = vst.msk [vmem:[#allocation2] sm:$0xff] %vm109, %v108
      %v111 = vld [vmem:[#allocation14] sm:$0xff]
      %112 = vst.msk [vmem:[#allocation3] sm:$0xff] %vm109, %v111
    $region53: #{tpu_custom_call.1} parent=1 // pred_fallthru
      _
    %v113 = vld [vmem:[#allocation5] sm:$0xff]
    %v114 = vld [vmem:[#allocation5 + $0x8] sm:$0xff]
    %v115 = vld [vmem:[#allocation5 + $0x10] sm:$0xff]
    %v116 = vld [vmem:[#allocation5 + $0x18] sm:$0xff]
    %v117 = vld [vmem:[#allocation5 + $0x20] sm:$0xff]
    %v118 = vld [vmem:[#allocation5 + $0x28] sm:$0xff]
    %v119 = vld [vmem:[#allocation5 + $0x30] sm:$0xff]
    %v120 = vld [vmem:[#allocation5 + $0x38] sm:$0xff]
    %v121 = vld [vmem:[#allocation8] sm:$0xff]
    %v122 = vld [vmem:[#allocation8 + $0x8] sm:$0xff]
    %v123 = vld [vmem:[#allocation8 + $0x10] sm:$0xff]
    %v124 = vld [vmem:[#allocation8 + $0x18] sm:$0xff]
    %v125 = vld [vmem:[#allocation8 + $0x20] sm:$0xff]
    %v126 = vld [vmem:[#allocation8 + $0x28] sm:$0xff]
    %v127 = vld [vmem:[#allocation8 + $0x30] sm:$0xff]
    %v128 = vld [vmem:[#allocation8 + $0x38] sm:$0xff]
    %v129 = vld [vmem:[#allocation8 + $0x40] sm:$0xff]
    %v130 = vld [vmem:[#allocation8 + $0x48] sm:$0xff]
    %v131 = vld [vmem:[#allocation8 + $0x50] sm:$0xff]
    %v132 = vld [vmem:[#allocation8 + $0x58] sm:$0xff]
    %v133 = vld [vmem:[#allocation8 + $0x60] sm:$0xff]
    %v134 = vld [vmem:[#allocation8 + $0x68] sm:$0xff]
    %v135 = vld [vmem:[#allocation8 + $0x70] sm:$0xff]
    %v136 = vld [vmem:[#allocation8 + $0x78] sm:$0xff]
    %v137 = vld [vmem:[#allocation11] sm:$0x1]
    %v139 = vlaneseq
    %v140 = vshrl.u32 %v139, 7
    %v141 = vsub.s32 0, %v140
    %v142 = vrot.slane %v137, %v141
    %144 = vmatprep.subr.mxu0 0.0
    %145 = vmatpush1.msra.mxu0 %v121
    %146 = vmatprep.subr.mxu0 0.0
    %147 = vmatpush1.msra.mxu0 %v122
    %148 = vmatprep.subr.mxu0 0.0
    %149 = vmatpush1.msra.mxu0 %v123
    %150 = vmatprep.subr.mxu0 0.0
    %151 = vmatpush1.msra.mxu0 %v124
    %152 = vmatprep.subr.mxu0 0.0
    %153 = vmatpush1.msra.mxu0 %v125
    %154 = vmatprep.subr.mxu0 0.0
    %155 = vmatpush1.msra.mxu0 %v126
    %156 = vmatprep.subr.mxu0 0.0
    %157 = vmatpush1.msra.mxu0 %v127
    %158 = vmatprep.subr.mxu0 0.0
    %159 = vmatpush1.msra.mxu0 %v128
    %160 = vmatprep.subr.mxu0 0.0
    %161 = vmatpush1.msra.mxu0 %v129
    %162 = vmatprep.subr.mxu0 0.0
    %163 = vmatpush1.msra.mxu0 %v130
    %164 = vmatprep.subr.mxu0 0.0
    %165 = vmatpush1.msra.mxu0 %v131
    %166 = vmatprep.subr.mxu0 0.0
    %167 = vmatpush1.msra.mxu0 %v132
    %168 = vmatprep.subr.mxu0 0.0
    %169 = vmatpush1.msra.mxu0 %v133
    %170 = vmatprep.subr.mxu0 0.0
    %171 = vmatpush1.msra.mxu0 %v134
    %172 = vmatprep.subr.mxu0 0.0
    %173 = vmatpush1.msra.mxu0 %v135
    %174 = vmatprep.subr.mxu0 0.0
    %175 = vmatpush1.msra.mxu0 %v136
    %176 = vmatprep.subr.mxu0 0.0
    %177 = vmatpush1.msra.mxu0 0.0
    %178 = vmatprep.subr.mxu0 0.0
    %179 = vmatpush1.msra.mxu0 0.0
    %180 = vmatprep.subr.mxu0 0.0
    %181 = vmatpush1.msra.mxu0 0.0
    %182 = vmatprep.subr.mxu0 0.0
    %183 = vmatpush1.msra.mxu0 0.0
    %184 = vmatprep.subr.mxu0 0.0
    %185 = vmatpush1.msra.mxu0 0.0
    %186 = vmatprep.subr.mxu0 0.0
    %187 = vmatpush1.msra.mxu0 0.0
    %188 = vmatprep.subr.mxu0 0.0
    %189 = vmatpush1.msra.mxu0 0.0
    %190 = vmatprep.subr.mxu0 0.0
    %191 = vmatpush1.msra.mxu0 0.0
    %192 = vmatprep.subr.mxu0 0.0
    %193 = vmatpush1.msra.mxu0 0.0
    %194 = vmatprep.subr.mxu0 0.0
    %195 = vmatpush1.msra.mxu0 0.0
    %196 = vmatprep.subr.mxu0 0.0
    %197 = vmatpush1.msra.mxu0 0.0
    %198 = vmatprep.subr.mxu0 0.0
    %199 = vmatpush1.msra.mxu0 0.0
    %200 = vmatprep.subr.mxu0 0.0
    %201 = vmatpush1.msra.mxu0 0.0
    %202 = vmatprep.subr.mxu0 0.0
    %203 = vmatpush1.msra.mxu0 0.0
    %204 = vmatprep.subr.mxu0 0.0
    %205 = vmatpush1.msra.mxu0 0.0
    %206 = vmatprep.subr.mxu0 0.0
    %207 = vmatpush1.msra.mxu0 0.0
    %208 = vmatprep.mubr.f32.mxu0 0.0
    %209 = vmatmul.mubr.f32.gmra.mrb[0].mxu0 %v113
    %v210 = vpop.f32.mrb[0].mxu0
    %v211 = vadd.f32 %v142, %v210
    %v212 = vpop.f32.mrb[0].mxu0
    %213 = vmatprep.mubr.f32.mxu0 0.0
    %214 = vmatmul.mubr.f32.gmra.mrb[0].mxu0 %v114
    %v215 = vpop.f32.mrb[0].mxu0
    %v216 = vadd.f32 %v142, %v215
    %v217 = vpop.f32.mrb[0].mxu0
    %218 = vmatprep.mubr.f32.mxu0 0.0
    %219 = vmatmul.mubr.f32.gmra.mrb[0].mxu0 %v115
    %v220 = vpop.f32.mrb[0].mxu0
    %v221 = vadd.f32 %v142, %v220
    %v222 = vpop.f32.mrb[0].mxu0
    %223 = vmatprep.mubr.f32.mxu0 0.0
    %224 = vmatmul.mubr.f32.gmra.mrb[0].mxu0 %v116
    %v225 = vpop.f32.mrb[0].mxu0
    %v226 = vadd.f32 %v142, %v225
    %v227 = vpop.f32.mrb[0].mxu0
    %228 = vmatprep.mubr.f32.mxu0 0.0
    %229 = vmatmul.mubr.f32.gmra.mrb[0].mxu0 %v117
    %v230 = vpop.f32.mrb[0].mxu0
    %v231 = vadd.f32 %v142, %v230
    %v232 = vpop.f32.mrb[0].mxu0
    %233 = vmatprep.mubr.f32.mxu0 0.0
    %234 = vmatmul.mubr.f32.gmra.mrb[0].mxu0 %v118
    %v235 = vpop.f32.mrb[0].mxu0
    %v236 = vadd.f32 %v142, %v235
    %v237 = vpop.f32.mrb[0].mxu0
    %238 = vmatprep.mubr.f32.mxu0 0.0
    %239 = vmatmul.mubr.f32.gmra.mrb[0].mxu0 %v119
    %v240 = vpop.f32.mrb[0].mxu0
    %v241 = vadd.f32 %v142, %v240
    %v242 = vpop.f32.mrb[0].mxu0
    %243 = vmatprep.mubr.f32.mxu0 0.0
    %244 = vmatmul.mubr.f32.gmra.mrb[0].mxu0 %v120
    %v245 = vpop.f32.mrb[0].mxu0
    %v246 = vadd.f32 %v142, %v245
    %v247 = vpop.f32.mrb[0].mxu0
    %248 = vdwg.mxu0
    %249 = vst [vmem:[#allocation4] sm:$0xff] %v211
    %250 = vst [vmem:[#allocation4 + $0x8] sm:$0xff] %v216
    %251 = vst [vmem:[#allocation4 + $0x10] sm:$0xff] %v221
    %252 = vst [vmem:[#allocation4 + $0x18] sm:$0xff] %v226
    %253 = vst [vmem:[#allocation4 + $0x20] sm:$0xff] %v231
    %254 = vst [vmem:[#allocation4 + $0x28] sm:$0xff] %v236
    %255 = vst [vmem:[#allocation4 + $0x30] sm:$0xff] %v241
    %256 = vst [vmem:[#allocation4 + $0x38] sm:$0xff] %v246
    %v257 = vld [vmem:[#allocation2] sm:$0xff]
    %v258 = vld [vmem:[#allocation3] sm:$0xff]
    %v259 = vld [vmem:[#allocation4] sm:$0xff]
    %v260 = vld [vmem:[#allocation10] sm:$0xff]
    %v261 = vld [vmem:[#allocation10 + $0x8] sm:$0xff]
    %v262 = vld [vmem:[#allocation10 + $0x10] sm:$0xff]
    %v263 = vld [vmem:[#allocation10 + $0x18] sm:$0xff]
    %vm264 = vcmask 261120
    %v266 = vsel %vm264, %v257, 0
    %268 = vmatprep.subr.mxu0 0.0
    %269 = vmatpush1.msra.mxu0 %v260
    %270 = vmatprep.subr.mxu0 0.0
    %271 = vmatpush1.msra.mxu0 %v261
    %272 = vmatprep.subr.mxu0 0.0
    %273 = vmatpush1.msra.mxu0 %v262
    %274 = vmatprep.subr.mxu0 0.0
    %275 = vmatpush1.msra.mxu0 %v263
    %276 = vmatprep.subr.mxu0 0.0
    %277 = vmatpush1.msra.mxu0 0.0
    %278 = vmatprep.subr.mxu0 0.0
    %279 = vmatpush1.msra.mxu0 0.0
    %280 = vmatprep.subr.mxu0 0.0
    %281 = vmatpush1.msra.mxu0 0.0
    %282 = vmatprep.subr.mxu0 0.0
    %283 = vmatpush1.msra.mxu0 0.0
    %284 = vmatprep.subr.mxu0 0.0
    %285 = vmatpush1.msra.mxu0 0.0
    %286 = vmatprep.subr.mxu0 0.0
    %287 = vmatpush1.msra.mxu0 0.0
    %288 = vmatprep.subr.mxu0 0.0
    %289 = vmatpush1.msra.mxu0 0.0
    %290 = vmatprep.subr.mxu0 0.0
    %291 = vmatpush1.msra.mxu0 0.0
    %292 = vmatprep.subr.mxu0 0.0
    %293 = vmatpush1.msra.mxu0 0.0
    %294 = vmatprep.subr.mxu0 0.0
    %295 = vmatpush1.msra.mxu0 0.0
    %296 = vmatprep.subr.mxu0 0.0
    %297 = vmatpush1.msra.mxu0 0.0
    %298 = vmatprep.subr.mxu0 0.0
    %299 = vmatpush1.msra.mxu0 0.0
    %300 = vmatprep.subr.mxu0 0.0
    %301 = vmatpush1.msra.mxu0 0.0
    %302 = vmatprep.subr.mxu0 0.0
    %303 = vmatpush1.msra.mxu0 0.0
    %304 = vmatprep.subr.mxu0 0.0
    %305 = vmatpush1.msra.mxu0 0.0
    %306 = vmatprep.subr.mxu0 0.0
    %307 = vmatpush1.msra.mxu0 0.0
    %308 = vmatprep.subr.mxu0 0.0
    %309 = vmatpush1.msra.mxu0 0.0
    %310 = vmatprep.subr.mxu0 0.0
    %311 = vmatpush1.msra.mxu0 0.0
    %312 = vmatprep.subr.mxu0 0.0
    %313 = vmatpush1.msra.mxu0 0.0
    %314 = vmatprep.subr.mxu0 0.0
    %315 = vmatpush1.msra.mxu0 0.0
    %316 = vmatprep.subr.mxu0 0.0
    %317 = vmatpush1.msra.mxu0 0.0
    %318 = vmatprep.subr.mxu0 0.0
    %319 = vmatpush1.msra.mxu0 0.0
    %320 = vmatprep.subr.mxu0 0.0
    %321 = vmatpush1.msra.mxu0 0.0
    %322 = vmatprep.subr.mxu0 0.0
    %323 = vmatpush1.msra.mxu0 0.0
    %324 = vmatprep.subr.mxu0 0.0
    %325 = vmatpush1.msra.mxu0 0.0
    %326 = vmatprep.subr.mxu0 0.0
    %327 = vmatpush1.msra.mxu0 0.0
    %328 = vmatprep.subr.mxu0 0.0
    %329 = vmatpush1.msra.mxu0 0.0
    %330 = vmatprep.subr.mxu0 0.0
    %331 = vmatpush1.msra.mxu0 0.0
    %332 = vmatprep.mubr.f32.mxu0 0.0
    %333 = vmatmul.mubr.f32.gmra.mrb[0].mxu0 %v266
    %v334 = vpop.f32.mrb[0].mxu0
    %v335 = vadd.f32 0.0, %v334
    %v336 = vpop.f32.mrb[0].mxu0
    %337 = vdwg.mxu0
    %v338 = vadd.f32 %v259, %v335
    %v339 = vxor.u32 %v338, 2147483648
    %v340 = vmul.f32 %v339, 1.442695
    %v341 = vpow.pop %v340
    %v342 = vadd.f32 %v341, 1.0
    %v343 = vrcp.pop %v342
    %v344 = vmul.f32 1.0, %v343
    %v345 = vtanh.pop %v338
    %347 = vrot.lane.b32.xlu0 %v258, 32
    %v348 = vpop.permute.xlu0 %347
    %v350 = vmul.f32 %v344, %v348
    %352 = vrot.lane.b32.xlu0 %v345, 64
    %v353 = vpop.permute.xlu0 %352
    %v355 = vmul.f32 %v344, %v353
    %357 = vrot.lane.b32.xlu0 %v355, 32
    %v358 = vpop.permute.xlu0 %357
    %v360 = vadd.f32 %v350, %v358
    %v361 = vtanh.pop %v360
    %363 = vrot.lane.b32.xlu0 %v361, 64
    %v364 = vpop.permute.xlu0 %363
    %v366 = vmul.f32 %v344, %v364
    %368 = vrot.lane.b32.xlu0 %v366, 32
    %v369 = vpop.permute.xlu0 %368
    %371 = vst.msk [vmem:[#allocation16] sm:$0xff] %vm264, %v369
    %s372 = scalar_lea.vmem [#allocation4], 8
    %v373 = vld [vmem:[%s372] sm:$0xff]
    %v374 = vld [vmem:[#allocation10] sm:$0xff]
    %v375 = vld [vmem:[#allocation10 + $0x8] sm:$0xff]
    %v376 = vld [vmem:[#allocation10 + $0x10] sm:$0xff]
    %v377 = vld [vmem:[#allocation10 + $0x18] sm:$0xff]
    %v378 = vsel %vm264, %v369, 0
    %380 = vmatprep.subr.mxu0 0.0
    %381 = vmatpush1.msra.mxu0 %v374
    %382 = vmatprep.subr.mxu0 0.0
    %383 = vmatpush1.msra.mxu0 %v375
    %384 = vmatprep.subr.mxu0 0.0
    %385 = vmatpush1.msra.mxu0 %v376
    %386 = vmatprep.subr.mxu0 0.0
    %387 = vmatpush1.msra.mxu0 %v377
    %388 = vmatprep.subr.mxu0 0.0
    %389 = vmatpush1.msra.mxu0 0.0
    %390 = vmatprep.subr.mxu0 0.0
    %391 = vmatpush1.msra.mxu0 0.0
    %392 = vmatprep.subr.mxu0 0.0
    %393 = vmatpush1.msra.mxu0 0.0
    %394 = vmatprep.subr.mxu0 0.0
    %395 = vmatpush1.msra.mxu0 0.0
    %396 = vmatprep.subr.mxu0 0.0
    %397 = vmatpush1.msra.mxu0 0.0
    %398 = vmatprep.subr.mxu0 0.0
    %399 = vmatpush1.msra.mxu0 0.0
    %400 = vmatprep.subr.mxu0 0.0
    %401 = vmatpush1.msra.mxu0 0.0
    %402 = vmatprep.subr.mxu0 0.0
    %403 = vmatpush1.msra.mxu0 0.0
    %404 = vmatprep.subr.mxu0 0.0
    %405 = vmatpush1.msra.mxu0 0.0
    %406 = vmatprep.subr.mxu0 0.0
    %407 = vmatpush1.msra.mxu0 0.0
    %408 = vmatprep.subr.mxu0 0.0
    %409 = vmatpush1.msra.mxu0 0.0
    %410 = vmatprep.subr.mxu0 0.0
    %411 = vmatpush1.msra.mxu0 0.0
    %412 = vmatprep.subr.mxu0 0.0
    %413 = vmatpush1.msra.mxu0 0.0
    %414 = vmatprep.subr.mxu0 0.0
    %415 = vmatpush1.msra.mxu0 0.0
    %416 = vmatprep.subr.mxu0 0.0
    %417 = vmatpush1.msra.mxu0 0.0
    %418 = vmatprep.subr.mxu0 0.0
    %419 = vmatpush1.msra.mxu0 0.0
    %420 = vmatprep.subr.mxu0 0.0
    %421 = vmatpush1.msra.mxu0 0.0
    %422 = vmatprep.subr.mxu0 0.0
    %423 = vmatpush1.msra.mxu0 0.0
    %424 = vmatprep.subr.mxu0 0.0
    %425 = vmatpush1.msra.mxu0 0.0
    %426 = vmatprep.subr.mxu0 0.0
    %427 = vmatpush1.msra.mxu0 0.0
    %428 = vmatprep.subr.mxu0 0.0
    %429 = vmatpush1.msra.mxu0 0.0
    %430 = vmatprep.subr.mxu0 0.0
    %431 = vmatpush1.msra.mxu0 0.0
    %432 = vmatprep.subr.mxu0 0.0
    %433 = vmatpush1.msra.mxu0 0.0
    %434 = vmatprep.subr.mxu0 0.0
    %435 = vmatpush1.msra.mxu0 0.0
    %436 = vmatprep.subr.mxu0 0.0
    %437 = vmatpush1.msra.mxu0 0.0
    %438 = vmatprep.subr.mxu0 0.0
    %439 = vmatpush1.msra.mxu0 0.0
    %440 = vmatprep.subr.mxu0 0.0
    %441 = vmatpush1.msra.mxu0 0.0
    %442 = vmatprep.subr.mxu0 0.0
    %443 = vmatpush1.msra.mxu0 0.0
    %444 = vmatprep.mubr.f32.mxu0 0.0
    %445 = vmatmul.mubr.f32.gmra.mrb[0].mxu0 %v378
    %v446 = vpop.f32.mrb[0].mxu0
    %v447 = vadd.f32 0.0, %v446
    %v448 = vpop.f32.mrb[0].mxu0
    %449 = vdwg.mxu0
    %v450 = vadd.f32 %v373, %v447
    %v451 = vxor.u32 %v450, 2147483648
    %v452 = vmul.f32 %v451, 1.442695
    %v453 = vpow.pop %v452
    %v454 = vadd.f32 %v453, 1.0
    %v455 = vrcp.pop %v454
    %v456 = vmul.f32 1.0, %v455
    %v457 = vtanh.pop %v450
    %v458 = vmul.f32 %v456, %v360
    %460 = vrot.lane.b32.xlu0 %v457, 64
    %v461 = vpop.permute.xlu0 %460
    %v463 = vmul.f32 %v456, %v461
    %465 = vrot.lane.b32.xlu0 %v463, 32
    %v466 = vpop.permute.xlu0 %465
    %v468 = vadd.f32 %v458, %v466
    %v469 = vtanh.pop %v468
    %471 = vrot.lane.b32.xlu0 %v469, 64
    %v472 = vpop.permute.xlu0 %471
    %v474 = vmul.f32 %v456, %v472
    %476 = vrot.lane.b32.xlu0 %v474, 32
    %v477 = vpop.permute.xlu0 %476
    %s479 = scalar_lea.vmem [#allocation16], 8
    %480 = vst.msk [vmem:[%s479] sm:$0xff] %vm264, %v477
    %s481 = scalar_lea.vmem [#allocation4], 16
    %v482 = vld [vmem:[%s481] sm:$0xff]
    %v483 = vld [vmem:[#allocation10] sm:$0xff]
    %v484 = vld [vmem:[#allocation10 + $0x8] sm:$0xff]
    %v485 = vld [vmem:[#allocation10 + $0x10] sm:$0xff]
    %v486 = vld [vmem:[#allocation10 + $0x18] sm:$0xff]
    %v487 = vsel %vm264, %v477, 0
    %489 = vmatprep.subr.mxu0 0.0
    %490 = vmatpush1.msra.mxu0 %v483
    %491 = vmatprep.subr.mxu0 0.0
    %492 = vmatpush1.msra.mxu0 %v484
    %493 = vmatprep.subr.mxu0 0.0
    %494 = vmatpush1.msra.mxu0 %v485
    %495 = vmatprep.subr.mxu0 0.0
    %496 = vmatpush1.msra.mxu0 %v486
    %497 = vmatprep.subr.mxu0 0.0
    %498 = vmatpush1.msra.mxu0 0.0
    %499 = vmatprep.subr.mxu0 0.0
    %500 = vmatpush1.msra.mxu0 0.0
    %501 = vmatprep.subr.mxu0 0.0
    %502 = vmatpush1.msra.mxu0 0.0
    %503 = vmatprep.subr.mxu0 0.0
    %504 = vmatpush1.msra.mxu0 0.0
    %505 = vmatprep.subr.mxu0 0.0
    %506 = vmatpush1.msra.mxu0 0.0
    %507 = vmatprep.subr.mxu0 0.0
    %508 = vmatpush1.msra.mxu0 0.0
    %509 = vmatprep.subr.mxu0 0.0
    %510 = vmatpush1.msra.mxu0 0.0
    %511 = vmatprep.subr.mxu0 0.0
    %512 = vmatpush1.msra.mxu0 0.0
    %513 = vmatprep.subr.mxu0 0.0
    %514 = vmatpush1.msra.mxu0 0.0
    %515 = vmatprep.subr.mxu0 0.0
    %516 = vmatpush1.msra.mxu0 0.0
    %517 = vmatprep.subr.mxu0 0.0
    %518 = vmatpush1.msra.mxu0 0.0
    %519 = vmatprep.subr.mxu0 0.0
    %520 = vmatpush1.msra.mxu0 0.0
    %521 = vmatprep.subr.mxu0 0.0
    %522 = vmatpush1.msra.mxu0 0.0
    %523 = vmatprep.subr.mxu0 0.0
    %524 = vmatpush1.msra.mxu0 0.0
    %525 = vmatprep.subr.mxu0 0.0
    %526 = vmatpush1.msra.mxu0 0.0
    %527 = vmatprep.subr.mxu0 0.0
    %528 = vmatpush1.msra.mxu0 0.0
    %529 = vmatprep.subr.mxu0 0.0
    %530 = vmatpush1.msra.mxu0 0.0
    %531 = vmatprep.subr.mxu0 0.0
    %532 = vmatpush1.msra.mxu0 0.0
    %533 = vmatprep.subr.mxu0 0.0
    %534 = vmatpush1.msra.mxu0 0.0
    %535 = vmatprep.subr.mxu0 0.0
    %536 = vmatpush1.msra.mxu0 0.0
    %537 = vmatprep.subr.mxu0 0.0
    %538 = vmatpush1.msra.mxu0 0.0
    %539 = vmatprep.subr.mxu0 0.0
    %540 = vmatpush1.msra.mxu0 0.0
    %541 = vmatprep.subr.mxu0 0.0
    %542 = vmatpush1.msra.mxu0 0.0
    %543 = vmatprep.subr.mxu0 0.0
    %544 = vmatpush1.msra.mxu0 0.0
    %545 = vmatprep.subr.mxu0 0.0
    %546 = vmatpush1.msra.mxu0 0.0
    %547 = vmatprep.subr.mxu0 0.0
    %548 = vmatpush1.msra.mxu0 0.0
    %549 = vmatprep.subr.mxu0 0.0
    %550 = vmatpush1.msra.mxu0 0.0
    %551 = vmatprep.subr.mxu0 0.0
    %552 = vmatpush1.msra.mxu0 0.0
    %553 = vmatprep.mubr.f32.mxu0 0.0
    %554 = vmatmul.mubr.f32.gmra.mrb[0].mxu0 %v487
    %v555 = vpop.f32.mrb[0].mxu0
    %v556 = vadd.f32 0.0, %v555
    %v557 = vpop.f32.mrb[0].mxu0
    %558 = vdwg.mxu0
    %v559 = vadd.f32 %v482, %v556
    %v560 = vxor.u32 %v559, 2147483648
    %v561 = vmul.f32 %v560, 1.442695
    %v562 = vpow.pop %v561
    %v563 = vadd.f32 %v562, 1.0
    %v564 = vrcp.pop %v563
    %v565 = vmul.f32 1.0, %v564
    %v566 = vtanh.pop %v559
    %v567 = vmul.f32 %v565, %v468
    %569 = vrot.lane.b32.xlu0 %v566, 64
    %v570 = vpop.permute.xlu0 %569
    %v572 = vmul.f32 %v565, %v570
    %574 = vrot.lane.b32.xlu0 %v572, 32
    %v575 = vpop.permute.xlu0 %574
    %v577 = vadd.f32 %v567, %v575
    %v578 = vtanh.pop %v577
    %580 = vrot.lane.b32.xlu0 %v578, 64
    %v581 = vpop.permute.xlu0 %580
    %v583 = vmul.f32 %v565, %v581
    %585 = vrot.lane.b32.xlu0 %v583, 32
    %v586 = vpop.permute.xlu0 %585
    %s588 = scalar_lea.vmem [#allocation16], 16
    %589 = vst.msk [vmem:[%s588] sm:$0xff] %vm264, %v586
    %s590 = scalar_lea.vmem [#allocation4], 24
    %v591 = vld [vmem:[%s590] sm:$0xff]
    %v592 = vld [vmem:[#allocation10] sm:$0xff]
    %v593 = vld [vmem:[#allocation10 + $0x8] sm:$0xff]
    %v594 = vld [vmem:[#allocation10 + $0x10] sm:$0xff]
    %v595 = vld [vmem:[#allocation10 + $0x18] sm:$0xff]
    %v596 = vsel %vm264, %v586, 0
    %598 = vmatprep.subr.mxu0 0.0
    %599 = vmatpush1.msra.mxu0 %v592
    %600 = vmatprep.subr.mxu0 0.0
    %601 = vmatpush1.msra.mxu0 %v593
    %602 = vmatprep.subr.mxu0 0.0
    %603 = vmatpush1.msra.mxu0 %v594
    %604 = vmatprep.subr.mxu0 0.0
    %605 = vmatpush1.msra.mxu0 %v595
    %606 = vmatprep.subr.mxu0 0.0
    %607 = vmatpush1.msra.mxu0 0.0
    %608 = vmatprep.subr.mxu0 0.0
    %609 = vmatpush1.msra.mxu0 0.0
    %610 = vmatprep.subr.mxu0 0.0
    %611 = vmatpush1.msra.mxu0 0.0
    %612 = vmatprep.subr.mxu0 0.0
    %613 = vmatpush1.msra.mxu0 0.0
    %614 = vmatprep.subr.mxu0 0.0
    %615 = vmatpush1.msra.mxu0 0.0
    %616 = vmatprep.subr.mxu0 0.0
    %617 = vmatpush1.msra.mxu0 0.0
    %618 = vmatprep.subr.mxu0 0.0
    %619 = vmatpush1.msra.mxu0 0.0
    %620 = vmatprep.subr.mxu0 0.0
    %621 = vmatpush1.msra.mxu0 0.0
    %622 = vmatprep.subr.mxu0 0.0
    %623 = vmatpush1.msra.mxu0 0.0
    %624 = vmatprep.subr.mxu0 0.0
    %625 = vmatpush1.msra.mxu0 0.0
    %626 = vmatprep.subr.mxu0 0.0
    %627 = vmatpush1.msra.mxu0 0.0
    %628 = vmatprep.subr.mxu0 0.0
    %629 = vmatpush1.msra.mxu0 0.0
    %630 = vmatprep.subr.mxu0 0.0
    %631 = vmatpush1.msra.mxu0 0.0
    %632 = vmatprep.subr.mxu0 0.0
    %633 = vmatpush1.msra.mxu0 0.0
    %634 = vmatprep.subr.mxu0 0.0
    %635 = vmatpush1.msra.mxu0 0.0
    %636 = vmatprep.subr.mxu0 0.0
    %637 = vmatpush1.msra.mxu0 0.0
    %638 = vmatprep.subr.mxu0 0.0
    %639 = vmatpush1.msra.mxu0 0.0
    %640 = vmatprep.subr.mxu0 0.0
    %641 = vmatpush1.msra.mxu0 0.0
    %642 = vmatprep.subr.mxu0 0.0
    %643 = vmatpush1.msra.mxu0 0.0
    %644 = vmatprep.subr.mxu0 0.0
    %645 = vmatpush1.msra.mxu0 0.0
    %646 = vmatprep.subr.mxu0 0.0
    %647 = vmatpush1.msra.mxu0 0.0
    %648 = vmatprep.subr.mxu0 0.0
    %649 = vmatpush1.msra.mxu0 0.0
    %650 = vmatprep.subr.mxu0 0.0
    %651 = vmatpush1.msra.mxu0 0.0
    %652 = vmatprep.subr.mxu0 0.0
    %653 = vmatpush1.msra.mxu0 0.0
    %654 = vmatprep.subr.mxu0 0.0
    %655 = vmatpush1.msra.mxu0 0.0
    %656 = vmatprep.subr.mxu0 0.0
    %657 = vmatpush1.msra.mxu0 0.0
    %658 = vmatprep.subr.mxu0 0.0
    %659 = vmatpush1.msra.mxu0 0.0
    %660 = vmatprep.subr.mxu0 0.0
    %661 = vmatpush1.msra.mxu0 0.0
    %662 = vmatprep.mubr.f32.mxu0 0.0
    %663 = vmatmul.mubr.f32.gmra.mrb[0].mxu0 %v596
    %v664 = vpop.f32.mrb[0].mxu0
    %v665 = vadd.f32 0.0, %v664
    %v666 = vpop.f32.mrb[0].mxu0
    %667 = vdwg.mxu0
    %v668 = vadd.f32 %v591, %v665
    %v669 = vxor.u32 %v668, 2147483648
    %v670 = vmul.f32 %v669, 1.442695
    %v671 = vpow.pop %v670
    %v672 = vadd.f32 %v671, 1.0
    %v673 = vrcp.pop %v672
    %v674 = vmul.f32 1.0, %v673
    %v675 = vtanh.pop %v668
    %v676 = vmul.f32 %v674, %v577
    %678 = vrot.lane.b32.xlu0 %v675, 64
    %v679 = vpop.permute.xlu0 %678
    %v681 = vmul.f32 %v674, %v679
    %683 = vrot.lane.b32.xlu0 %v681, 32
    %v684 = vpop.permute.xlu0 %683
    %v686 = vadd.f32 %v676, %v684
    %v687 = vtanh.pop %v686
    %689 = vrot.lane.b32.xlu0 %v687, 64
    %v690 = vpop.permute.xlu0 %689
    %v692 = vmul.f32 %v674, %v690
    %694 = vrot.lane.b32.xlu0 %v692, 32
    %v695 = vpop.permute.xlu0 %694
    %s697 = scalar_lea.vmem [#allocation16], 24
    %698 = vst.msk [vmem:[%s697] sm:$0xff] %vm264, %v695
    %s699 = scalar_lea.vmem [#allocation4], 32
    %v700 = vld [vmem:[%s699] sm:$0xff]
    %v701 = vld [vmem:[#allocation10] sm:$0xff]
    %v702 = vld [vmem:[#allocation10 + $0x8] sm:$0xff]
    %v703 = vld [vmem:[#allocation10 + $0x10] sm:$0xff]
    %v704 = vld [vmem:[#allocation10 + $0x18] sm:$0xff]
    %v705 = vsel %vm264, %v695, 0
    %707 = vmatprep.subr.mxu0 0.0
    %708 = vmatpush1.msra.mxu0 %v701
    %709 = vmatprep.subr.mxu0 0.0
    %710 = vmatpush1.msra.mxu0 %v702
    %711 = vmatprep.subr.mxu0 0.0
    %712 = vmatpush1.msra.mxu0 %v703
    %713 = vmatprep.subr.mxu0 0.0
    %714 = vmatpush1.msra.mxu0 %v704
    %715 = vmatprep.subr.mxu0 0.0
    %716 = vmatpush1.msra.mxu0 0.0
    %717 = vmatprep.subr.mxu0 0.0
    %718 = vmatpush1.msra.mxu0 0.0
    %719 = vmatprep.subr.mxu0 0.0
    %720 = vmatpush1.msra.mxu0 0.0
    %721 = vmatprep.subr.mxu0 0.0
    %722 = vmatpush1.msra.mxu0 0.0
    %723 = vmatprep.subr.mxu0 0.0
    %724 = vmatpush1.msra.mxu0 0.0
    %725 = vmatprep.subr.mxu0 0.0
    %726 = vmatpush1.msra.mxu0 0.0
    %727 = vmatprep.subr.mxu0 0.0
    %728 = vmatpush1.msra.mxu0 0.0
    %729 = vmatprep.subr.mxu0 0.0
    %730 = vmatpush1.msra.mxu0 0.0
    %731 = vmatprep.subr.mxu0 0.0
    %732 = vmatpush1.msra.mxu0 0.0
    %733 = vmatprep.subr.mxu0 0.0
    %734 = vmatpush1.msra.mxu0 0.0
    %735 = vmatprep.subr.mxu0 0.0
    %736 = vmatpush1.msra.mxu0 0.0
    %737 = vmatprep.subr.mxu0 0.0
    %738 = vmatpush1.msra.mxu0 0.0
    %739 = vmatprep.subr.mxu0 0.0
    %740 = vmatpush1.msra.mxu0 0.0
    %741 = vmatprep.subr.mxu0 0.0
    %742 = vmatpush1.msra.mxu0 0.0
    %743 = vmatprep.subr.mxu0 0.0
    %744 = vmatpush1.msra.mxu0 0.0
    %745 = vmatprep.subr.mxu0 0.0
    %746 = vmatpush1.msra.mxu0 0.0
    %747 = vmatprep.subr.mxu0 0.0
    %748 = vmatpush1.msra.mxu0 0.0
    %749 = vmatprep.subr.mxu0 0.0
    %750 = vmatpush1.msra.mxu0 0.0
    %751 = vmatprep.subr.mxu0 0.0
    %752 = vmatpush1.msra.mxu0 0.0
    %753 = vmatprep.subr.mxu0 0.0
    %754 = vmatpush1.msra.mxu0 0.0
    %755 = vmatprep.subr.mxu0 0.0
    %756 = vmatpush1.msra.mxu0 0.0
    %757 = vmatprep.subr.mxu0 0.0
    %758 = vmatpush1.msra.mxu0 0.0
    %759 = vmatprep.subr.mxu0 0.0
    %760 = vmatpush1.msra.mxu0 0.0
    %761 = vmatprep.subr.mxu0 0.0
    %762 = vmatpush1.msra.mxu0 0.0
    %763 = vmatprep.subr.mxu0 0.0
    %764 = vmatpush1.msra.mxu0 0.0
    %765 = vmatprep.subr.mxu0 0.0
    %766 = vmatpush1.msra.mxu0 0.0
    %767 = vmatprep.subr.mxu0 0.0
    %768 = vmatpush1.msra.mxu0 0.0
    %769 = vmatprep.subr.mxu0 0.0
    %770 = vmatpush1.msra.mxu0 0.0
    %771 = vmatprep.mubr.f32.mxu0 0.0
    %772 = vmatmul.mubr.f32.gmra.mrb[0].mxu0 %v705
    %v773 = vpop.f32.mrb[0].mxu0
    %v774 = vadd.f32 0.0, %v773
    %v775 = vpop.f32.mrb[0].mxu0
    %776 = vdwg.mxu0
    %v777 = vadd.f32 %v700, %v774
    %v778 = vxor.u32 %v777, 2147483648
    %v779 = vmul.f32 %v778, 1.442695
    %v780 = vpow.pop %v779
    %v781 = vadd.f32 %v780, 1.0
    %v782 = vrcp.pop %v781
    %v783 = vmul.f32 1.0, %v782
    %v784 = vtanh.pop %v777
    %v785 = vmul.f32 %v783, %v686
    %787 = vrot.lane.b32.xlu0 %v784, 64
    %v788 = vpop.permute.xlu0 %787
    %v790 = vmul.f32 %v783, %v788
    %792 = vrot.lane.b32.xlu0 %v790, 32
    %v793 = vpop.permute.xlu0 %792
    %v795 = vadd.f32 %v785, %v793
    %v796 = vtanh.pop %v795
    %798 = vrot.lane.b32.xlu0 %v796, 64
    %v799 = vpop.permute.xlu0 %798
    %v801 = vmul.f32 %v783, %v799
    %803 = vrot.lane.b32.xlu0 %v801, 32
    %v804 = vpop.permute.xlu0 %803
    %s806 = scalar_lea.vmem [#allocation16], 32
    %807 = vst.msk [vmem:[%s806] sm:$0xff] %vm264, %v804
    %s808 = scalar_lea.vmem [#allocation4], 40
    %v809 = vld [vmem:[%s808] sm:$0xff]
    %v810 = vld [vmem:[#allocation10] sm:$0xff]
    %v811 = vld [vmem:[#allocation10 + $0x8] sm:$0xff]
    %v812 = vld [vmem:[#allocation10 + $0x10] sm:$0xff]
    %v813 = vld [vmem:[#allocation10 + $0x18] sm:$0xff]
    %v814 = vsel %vm264, %v804, 0
    %816 = vmatprep.subr.mxu0 0.0
    %817 = vmatpush1.msra.mxu0 %v810
    %818 = vmatprep.subr.mxu0 0.0
    %819 = vmatpush1.msra.mxu0 %v811
    %820 = vmatprep.subr.mxu0 0.0
    %821 = vmatpush1.msra.mxu0 %v812
    %822 = vmatprep.subr.mxu0 0.0
    %823 = vmatpush1.msra.mxu0 %v813
    %824 = vmatprep.subr.mxu0 0.0
    %825 = vmatpush1.msra.mxu0 0.0
    %826 = vmatprep.subr.mxu0 0.0
    %827 = vmatpush1.msra.mxu0 0.0
    %828 = vmatprep.subr.mxu0 0.0
    %829 = vmatpush1.msra.mxu0 0.0
    %830 = vmatprep.subr.mxu0 0.0
    %831 = vmatpush1.msra.mxu0 0.0
    %832 = vmatprep.subr.mxu0 0.0
    %833 = vmatpush1.msra.mxu0 0.0
    %834 = vmatprep.subr.mxu0 0.0
    %835 = vmatpush1.msra.mxu0 0.0
    %836 = vmatprep.subr.mxu0 0.0
    %837 = vmatpush1.msra.mxu0 0.0
    %838 = vmatprep.subr.mxu0 0.0
    %839 = vmatpush1.msra.mxu0 0.0
    %840 = vmatprep.subr.mxu0 0.0
    %841 = vmatpush1.msra.mxu0 0.0
    %842 = vmatprep.subr.mxu0 0.0
    %843 = vmatpush1.msra.mxu0 0.0
    %844 = vmatprep.subr.mxu0 0.0
    %845 = vmatpush1.msra.mxu0 0.0
    %846 = vmatprep.subr.mxu0 0.0
    %847 = vmatpush1.msra.mxu0 0.0
    %848 = vmatprep.subr.mxu0 0.0
    %849 = vmatpush1.msra.mxu0 0.0
    %850 = vmatprep.subr.mxu0 0.0
    %851 = vmatpush1.msra.mxu0 0.0
    %852 = vmatprep.subr.mxu0 0.0
    %853 = vmatpush1.msra.mxu0 0.0
    %854 = vmatprep.subr.mxu0 0.0
    %855 = vmatpush1.msra.mxu0 0.0
    %856 = vmatprep.subr.mxu0 0.0
    %857 = vmatpush1.msra.mxu0 0.0
    %858 = vmatprep.subr.mxu0 0.0
    %859 = vmatpush1.msra.mxu0 0.0
    %860 = vmatprep.subr.mxu0 0.0
    %861 = vmatpush1.msra.mxu0 0.0
    %862 = vmatprep.subr.mxu0 0.0
    %863 = vmatpush1.msra.mxu0 0.0
    %864 = vmatprep.subr.mxu0 0.0
    %865 = vmatpush1.msra.mxu0 0.0
    %866 = vmatprep.subr.mxu0 0.0
    %867 = vmatpush1.msra.mxu0 0.0
    %868 = vmatprep.subr.mxu0 0.0
    %869 = vmatpush1.msra.mxu0 0.0
    %870 = vmatprep.subr.mxu0 0.0
    %871 = vmatpush1.msra.mxu0 0.0
    %872 = vmatprep.subr.mxu0 0.0
    %873 = vmatpush1.msra.mxu0 0.0
    %874 = vmatprep.subr.mxu0 0.0
    %875 = vmatpush1.msra.mxu0 0.0
    %876 = vmatprep.subr.mxu0 0.0
    %877 = vmatpush1.msra.mxu0 0.0
    %878 = vmatprep.subr.mxu0 0.0
    %879 = vmatpush1.msra.mxu0 0.0
    %880 = vmatprep.mubr.f32.mxu0 0.0
    %881 = vmatmul.mubr.f32.gmra.mrb[0].mxu0 %v814
    %v882 = vpop.f32.mrb[0].mxu0
    %v883 = vadd.f32 0.0, %v882
    %v884 = vpop.f32.mrb[0].mxu0
    %885 = vdwg.mxu0
    %v886 = vadd.f32 %v809, %v883
    %v887 = vxor.u32 %v886, 2147483648
    %v888 = vmul.f32 %v887, 1.442695
    %v889 = vpow.pop %v888
    %v890 = vadd.f32 %v889, 1.0
    %v891 = vrcp.pop %v890
    %v892 = vmul.f32 1.0, %v891
    %v893 = vtanh.pop %v886
    %v894 = vmul.f32 %v892, %v795
    %896 = vrot.lane.b32.xlu0 %v893, 64
    %v897 = vpop.permute.xlu0 %896
    %v899 = vmul.f32 %v892, %v897
    %901 = vrot.lane.b32.xlu0 %v899, 32
    %v902 = vpop.permute.xlu0 %901
    %v904 = vadd.f32 %v894, %v902
    %v905 = vtanh.pop %v904
    %907 = vrot.lane.b32.xlu0 %v905, 64
    %v908 = vpop.permute.xlu0 %907
    %v910 = vmul.f32 %v892, %v908
    %912 = vrot.lane.b32.xlu0 %v910, 32
    %v913 = vpop.permute.xlu0 %912
    %s915 = scalar_lea.vmem [#allocation16], 40
    %916 = vst.msk [vmem:[%s915] sm:$0xff] %vm264, %v913
    %s917 = scalar_lea.vmem [#allocation4], 48
    %v918 = vld [vmem:[%s917] sm:$0xff]
    %v919 = vld [vmem:[#allocation10] sm:$0xff]
    %v920 = vld [vmem:[#allocation10 + $0x8] sm:$0xff]
    %v921 = vld [vmem:[#allocation10 + $0x10] sm:$0xff]
    %v922 = vld [vmem:[#allocation10 + $0x18] sm:$0xff]
    %v923 = vsel %vm264, %v913, 0
    %925 = vmatprep.subr.mxu0 0.0
    %926 = vmatpush1.msra.mxu0 %v919
    %927 = vmatprep.subr.mxu0 0.0
    %928 = vmatpush1.msra.mxu0 %v920
    %929 = vmatprep.subr.mxu0 0.0
    %930 = vmatpush1.msra.mxu0 %v921
    %931 = vmatprep.subr.mxu0 0.0
    %932 = vmatpush1.msra.mxu0 %v922
    %933 = vmatprep.subr.mxu0 0.0
    %934 = vmatpush1.msra.mxu0 0.0
    %935 = vmatprep.subr.mxu0 0.0
    %936 = vmatpush1.msra.mxu0 0.0
    %937 = vmatprep.subr.mxu0 0.0
    %938 = vmatpush1.msra.mxu0 0.0
    %939 = vmatprep.subr.mxu0 0.0
    %940 = vmatpush1.msra.mxu0 0.0
    %941 = vmatprep.subr.mxu0 0.0
    %942 = vmatpush1.msra.mxu0 0.0
    %943 = vmatprep.subr.mxu0 0.0
    %944 = vmatpush1.msra.mxu0 0.0
    %945 = vmatprep.subr.mxu0 0.0
    %946 = vmatpush1.msra.mxu0 0.0
    %947 = vmatprep.subr.mxu0 0.0
    %948 = vmatpush1.msra.mxu0 0.0
    %949 = vmatprep.subr.mxu0 0.0
    %950 = vmatpush1.msra.mxu0 0.0
    %951 = vmatprep.subr.mxu0 0.0
    %952 = vmatpush1.msra.mxu0 0.0
    %953 = vmatprep.subr.mxu0 0.0
    %954 = vmatpush1.msra.mxu0 0.0
    %955 = vmatprep.subr.mxu0 0.0
    %956 = vmatpush1.msra.mxu0 0.0
    %957 = vmatprep.subr.mxu0 0.0
    %958 = vmatpush1.msra.mxu0 0.0
    %959 = vmatprep.subr.mxu0 0.0
    %960 = vmatpush1.msra.mxu0 0.0
    %961 = vmatprep.subr.mxu0 0.0
    %962 = vmatpush1.msra.mxu0 0.0
    %963 = vmatprep.subr.mxu0 0.0
    %964 = vmatpush1.msra.mxu0 0.0
    %965 = vmatprep.subr.mxu0 0.0
    %966 = vmatpush1.msra.mxu0 0.0
    %967 = vmatprep.subr.mxu0 0.0
    %968 = vmatpush1.msra.mxu0 0.0
    %969 = vmatprep.subr.mxu0 0.0
    %970 = vmatpush1.msra.mxu0 0.0
    %971 = vmatprep.subr.mxu0 0.0
    %972 = vmatpush1.msra.mxu0 0.0
    %973 = vmatprep.subr.mxu0 0.0
    %974 = vmatpush1.msra.mxu0 0.0
    %975 = vmatprep.subr.mxu0 0.0
    %976 = vmatpush1.msra.mxu0 0.0
    %977 = vmatprep.subr.mxu0 0.0
    %978 = vmatpush1.msra.mxu0 0.0
    %979 = vmatprep.subr.mxu0 0.0
    %980 = vmatpush1.msra.mxu0 0.0
    %981 = vmatprep.subr.mxu0 0.0
    %982 = vmatpush1.msra.mxu0 0.0
    %983 = vmatprep.subr.mxu0 0.0
    %984 = vmatpush1.msra.mxu0 0.0
    %985 = vmatprep.subr.mxu0 0.0
    %986 = vmatpush1.msra.mxu0 0.0
    %987 = vmatprep.subr.mxu0 0.0
    %988 = vmatpush1.msra.mxu0 0.0
    %989 = vmatprep.mubr.f32.mxu0 0.0
    %990 = vmatmul.mubr.f32.gmra.mrb[0].mxu0 %v923
    %v991 = vpop.f32.mrb[0].mxu0
    %v992 = vadd.f32 0.0, %v991
    %v993 = vpop.f32.mrb[0].mxu0
    %994 = vdwg.mxu0
    %v995 = vadd.f32 %v918, %v992
    %v996 = vxor.u32 %v995, 2147483648
    %v997 = vmul.f32 %v996, 1.442695
    %v998 = vpow.pop %v997
    %v999 = vadd.f32 %v998, 1.0
    %v1000 = vrcp.pop %v999
    %v1001 = vmul.f32 1.0, %v1000
    %v1002 = vtanh.pop %v995
    %v1003 = vmul.f32 %v1001, %v904
    %1005 = vrot.lane.b32.xlu0 %v1002, 64
    %v1006 = vpop.permute.xlu0 %1005
    %v1008 = vmul.f32 %v1001, %v1006
    %1010 = vrot.lane.b32.xlu0 %v1008, 32
    %v1011 = vpop.permute.xlu0 %1010
    %v1013 = vadd.f32 %v1003, %v1011
    %v1014 = vtanh.pop %v1013
    %1016 = vrot.lane.b32.xlu0 %v1014, 64
    %v1017 = vpop.permute.xlu0 %1016
    %v1019 = vmul.f32 %v1001, %v1017
    %1021 = vrot.lane.b32.xlu0 %v1019, 32
    %v1022 = vpop.permute.xlu0 %1021
    %s1024 = scalar_lea.vmem [#allocation16], 48
    %1025 = vst.msk [vmem:[%s1024] sm:$0xff] %vm264, %v1022
    %s1026 = scalar_lea.vmem [#allocation4], 56
    %v1027 = vld [vmem:[%s1026] sm:$0xff]
    %v1028 = vld [vmem:[#allocation10] sm:$0xff]
    %v1029 = vld [vmem:[#allocation10 + $0x8] sm:$0xff]
    %v1030 = vld [vmem:[#allocation10 + $0x10] sm:$0xff]
    %v1031 = vld [vmem:[#allocation10 + $0x18] sm:$0xff]
    %v1032 = vsel %vm264, %v1022, 0
    %1034 = vmatprep.subr.mxu0 0.0
    %1035 = vmatpush1.msra.mxu0 %v1028
    %1036 = vmatprep.subr.mxu0 0.0
    %1037 = vmatpush1.msra.mxu0 %v1029
    %1038 = vmatprep.subr.mxu0 0.0
    %1039 = vmatpush1.msra.mxu0 %v1030
    %1040 = vmatprep.subr.mxu0 0.0
    %1041 = vmatpush1.msra.mxu0 %v1031
    %1042 = vmatprep.subr.mxu0 0.0
    %1043 = vmatpush1.msra.mxu0 0.0
    %1044 = vmatprep.subr.mxu0 0.0
    %1045 = vmatpush1.msra.mxu0 0.0
    %1046 = vmatprep.subr.mxu0 0.0
    %1047 = vmatpush1.msra.mxu0 0.0
    %1048 = vmatprep.subr.mxu0 0.0
    %1049 = vmatpush1.msra.mxu0 0.0
    %1050 = vmatprep.subr.mxu0 0.0
    %1051 = vmatpush1.msra.mxu0 0.0
    %1052 = vmatprep.subr.mxu0 0.0
    %1053 = vmatpush1.msra.mxu0 0.0
    %1054 = vmatprep.subr.mxu0 0.0
    %1055 = vmatpush1.msra.mxu0 0.0
    %1056 = vmatprep.subr.mxu0 0.0
    %1057 = vmatpush1.msra.mxu0 0.0
    %1058 = vmatprep.subr.mxu0 0.0
    %1059 = vmatpush1.msra.mxu0 0.0
    %1060 = vmatprep.subr.mxu0 0.0
    %1061 = vmatpush1.msra.mxu0 0.0
    %1062 = vmatprep.subr.mxu0 0.0
    %1063 = vmatpush1.msra.mxu0 0.0
    %1064 = vmatprep.subr.mxu0 0.0
    %1065 = vmatpush1.msra.mxu0 0.0
    %1066 = vmatprep.subr.mxu0 0.0
    %1067 = vmatpush1.msra.mxu0 0.0
    %1068 = vmatprep.subr.mxu0 0.0
    %1069 = vmatpush1.msra.mxu0 0.0
    %1070 = vmatprep.subr.mxu0 0.0
    %1071 = vmatpush1.msra.mxu0 0.0
    %1072 = vmatprep.subr.mxu0 0.0
    %1073 = vmatpush1.msra.mxu0 0.0
    %1074 = vmatprep.subr.mxu0 0.0
    %1075 = vmatpush1.msra.mxu0 0.0
    %1076 = vmatprep.subr.mxu0 0.0
    %1077 = vmatpush1.msra.mxu0 0.0
    %1078 = vmatprep.subr.mxu0 0.0
    %1079 = vmatpush1.msra.mxu0 0.0
    %1080 = vmatprep.subr.mxu0 0.0
    %1081 = vmatpush1.msra.mxu0 0.0
    %1082 = vmatprep.subr.mxu0 0.0
    %1083 = vmatpush1.msra.mxu0 0.0
    %1084 = vmatprep.subr.mxu0 0.0
    %1085 = vmatpush1.msra.mxu0 0.0
    %1086 = vmatprep.subr.mxu0 0.0
    %1087 = vmatpush1.msra.mxu0 0.0
    %1088 = vmatprep.subr.mxu0 0.0
    %1089 = vmatpush1.msra.mxu0 0.0
    %1090 = vmatprep.subr.mxu0 0.0
    %1091 = vmatpush1.msra.mxu0 0.0
    %1092 = vmatprep.subr.mxu0 0.0
    %1093 = vmatpush1.msra.mxu0 0.0
    %1094 = vmatprep.subr.mxu0 0.0
    %1095 = vmatpush1.msra.mxu0 0.0
    %1096 = vmatprep.subr.mxu0 0.0
    %1097 = vmatpush1.msra.mxu0 0.0
    %1098 = vmatprep.mubr.f32.mxu0 0.0
    %1099 = vmatmul.mubr.f32.gmra.mrb[0].mxu0 %v1032
    %v1100 = vpop.f32.mrb[0].mxu0
    %v1101 = vadd.f32 0.0, %v1100
    %v1102 = vpop.f32.mrb[0].mxu0
    %1103 = vdwg.mxu0
    %v1104 = vadd.f32 %v1027, %v1101
    %v1105 = vxor.u32 %v1104, 2147483648
    %v1106 = vmul.f32 %v1105, 1.442695
    %v1107 = vpow.pop %v1106
    %v1108 = vadd.f32 %v1107, 1.0
    %v1109 = vrcp.pop %v1108
    %v1110 = vmul.f32 1.0, %v1109
    %v1111 = vtanh.pop %v1104
    %v1112 = vmul.f32 %v1110, %v1013
    %1114 = vrot.lane.b32.xlu0 %v1111, 64
    %v1115 = vpop.permute.xlu0 %1114
    %v1117 = vmul.f32 %v1110, %v1115
    %1119 = vrot.lane.b32.xlu0 %v1117, 32
    %v1120 = vpop.permute.xlu0 %1119
    %v1122 = vadd.f32 %v1112, %v1120
    %v1123 = vtanh.pop %v1122
    %1125 = vrot.lane.b32.xlu0 %v1123, 64
    %v1126 = vpop.permute.xlu0 %1125
    %v1128 = vmul.f32 %v1110, %v1126
    %1130 = vrot.lane.b32.xlu0 %v1128, 32
    %v1131 = vpop.permute.xlu0 %1130
    %s1133 = scalar_lea.vmem [#allocation16], 56
    %1134 = vst.msk [vmem:[%s1133] sm:$0xff] %vm264, %v1131
    %1135 = vst.msk [vmem:[#allocation2] sm:$0xff] %vm264, %v1131
    %1137 = vrot.lane.b32.xlu0 %v1122, 96
    %v1138 = vpop.permute.xlu0 %1137
    %1140 = vst.msk [vmem:[#allocation3] sm:$0xff] %vm264, %v1138
    // Predicated region
    $region54: #{tpu_custom_call.1} parent=1 // pred_check
      %p1141 = pneg %p104
    $region55: #{tpu_custom_call.1} parent=1 // pred_check_branch
      %1143 = sbr.rel (%p1141) target = $region57
    $region56: #{tpu_custom_call.1} parent=1 // pred_region
      %1144 = vst.msk [vmem:[#allocation17] sm:$0xff] %vm264, %v1131
      %1145 = vst.msk [vmem:[#allocation19] sm:$0xff] %vm264, %v1138
    $region57: #{tpu_custom_call.1} parent=1 // pred_fallthru
      _
    // Predicated region
    $region58: #{tpu_custom_call.1} parent=1 // pred_check
      _
    $region59: #{tpu_custom_call.1} parent=1 // pred_check_branch
      %1147 = sbr.rel (0) target = $region61
    $region60: #{tpu_custom_call.1} parent=1 // pred_region
      %s1149 = ssub.s32 1024, 1024
      %1150 = vsyncadd [#allocation7], %s1149
      %s1151 = sshll.u32 [#allocation16], 4
      %s1152 = int_to_ptr.vmem [resolvable:$true] %s1151
      %1157 = dma.vmem_to_hbm [thread:$0]  %s1152, 1024, %s6, [#allocation7], 128, 128, 8
    $region61: #{tpu_custom_call.1} parent=1 // pred_fallthru
      _
    // Predicated region
    $region62: #{tpu_custom_call.1} parent=1 // pred_check
      _
    $region63: #{tpu_custom_call.1} parent=1 // pred_check_branch
      %1159 = sbr.rel (0) target = $region65
    $region64: #{tpu_custom_call.1} parent=1 // pred_region
      %s1161 = ssub.s32 128, 128
      %1162 = vsyncadd [#allocation18], %s1161
      %s1164 = sshll.u32 [#allocation17], 4
      %s1165 = int_to_ptr.vmem [resolvable:$true] %s1164
      %1167 = dma.vmem_to_hbm [thread:$0]  %s1165, 128, %s7, [#allocation18]
    $region65: #{tpu_custom_call.1} parent=1 // pred_fallthru
      _
    // Predicated region
    $region66: #{tpu_custom_call.1} parent=1 // pred_check
      _
    $region67: #{tpu_custom_call.1} parent=1 // pred_check_branch
      %1169 = sbr.rel (0) target = $region69
    $region68: #{tpu_custom_call.1} parent=1 // pred_region
      %s1171 = ssub.s32 128, 128
      %1172 = vsyncadd [#allocation18], %s1171
      %s1174 = sshll.u32 [#allocation19], 4
      %s1175 = int_to_ptr.vmem [resolvable:$true] %s1174
      %1177 = dma.vmem_to_hbm [thread:$0]  %s1175, 128, %s8, [#allocation18]
    $region69: #{tpu_custom_call.1} parent=1 // pred_fallthru
      _
    // Predicated region
    $region70: #{tpu_custom_call.1} parent=1 // pred_check
      _
    $region71: #{tpu_custom_call.1} parent=1 // pred_check_branch
      %1179 = sbr.rel (0) target = $region73
    $region72: #{tpu_custom_call.1} parent=1 // pred_region
      %1180 = dma.done [#allocation7], 1024
    $region73: #{tpu_custom_call.1} parent=1 // pred_fallthru
      _
    // Predicated region
    $region74: #{tpu_custom_call.1} parent=1 // pred_check
      _
    $region75: #{tpu_custom_call.1} parent=1 // pred_check_branch
      %1182 = sbr.rel (0) target = $region77
    $region76: #{tpu_custom_call.1} parent=1 // pred_region
      %1183 = dma.done [#allocation18], 128
    $region77: #{tpu_custom_call.1} parent=1 // pred_fallthru
      _
    // Predicated region
    $region78: #{tpu_custom_call.1} parent=1 // pred_check
      _
    $region79: #{tpu_custom_call.1} parent=1 // pred_check_branch
      %1185 = sbr.rel (0) target = $region81
    $region80: #{tpu_custom_call.1} parent=1 // pred_region
      %1186 = dma.done [#allocation18], 128
    $region81: #{tpu_custom_call.1} parent=1 // pred_fallthru
      _
    %1187 = vsyncpa [#allocation6], 1
    %1188 = vsyncpa [#allocation9], 1
    %1189 = vsyncpa [#allocation12], 1
    %1190 = vsyncpa [#allocation15], 1
    %1191 = vsyncpa [#allocation7], 1
    %1192 = vsyncpa [#allocation18], 1

</llo_original>
